<compile_context>
chip_gen: v7x
topology: tpu7x:2x2x1
jax: 0.10.0
libtpu: 0.0.40
codegen_flags: <defaults>
</compile_context>

<pallas_src>
import functools

import numpy as np

import jax
import jax.numpy as jnp
from jax.experimental import pallas as pl
from jax.experimental.pallas import tpu as pltpu


# ----------------------------- trace-time (numpy) helpers -----------------------------

def _nearest_indices_np(out_len: int, in_len: int) -> np.ndarray:
    # PyTorch 'nearest': src = floor(dst * in / out).  Exact integer arithmetic.
    idx = (np.arange(out_len, dtype=np.int64) * in_len) // out_len
    return np.minimum(idx, in_len - 1)


def _tpu_vmem_and_megacore():
    """(physical VMEM bytes per core, chip has 2 TensorCores sharing the grid?)."""
    vmem = 64 << 20                     # conservative default: v7x has the smallest VMEM
    try:
        info = pltpu.get_tpu_info()
        vmem = int(getattr(info, "vmem_capacity_bytes", vmem))
    except Exception:
        pass
    two_tc = False
    try:
        kind = jax.devices()[0].device_kind.lower()
        two_tc = any(tag in kind for tag in ("v4", "v7", "tpu7"))
    except Exception:
        pass
    return vmem, two_tc


def _block_vmem_bytes(c_blk, h_in, w_in, h_f, w_f, in_itemsize, compute_itemsize):
    """Rough VMEM footprint of one grid step for a channel block of size c_blk."""
    s_in, s_out = h_in * w_in, h_f * w_f
    # Double-buffered input/output blocks (Pallas auto-pipelining).
    io = 2 * c_blk * (s_in + s_out) * in_itemsize
    # In-kernel intermediates: broadcast Gh, H-gathered block, W-gathered block.
    inter = c_blk * (h_f * h_in + h_f * w_in + s_out) * compute_itemsize
    # Possible dtype-cast copy of the input block (ints / f16 routed through f32).
    cast = c_blk * s_in * compute_itemsize if compute_itemsize != in_itemsize else 0
    return io + inter + cast


def _choose_c_block(c, n, h_in, w_in, h_f, w_f, in_itemsize, compute_itemsize,
                    vmem_capacity, two_tensorcores):
    """Largest channel block that divides C, respects dtype sublane packing, and fits
    ~40% of physical VMEM.  Only forces >=2 grid steps on 2-TensorCore (megacore) parts."""
    budget = int(0.40 * vmem_capacity)
    mult = max(1, 32 // in_itemsize)          # 8 for f32, 16 for bf16, 32 for int8/fp8

    divisors = [d for d in range(1, c + 1) if c % d == 0]
    nice = [d for d in divisors if d == c or d % mult == 0] or divisors

    def fits(d):
        return _block_vmem_bytes(d, h_in, w_in, h_f, w_f,
                                 in_itemsize, compute_itemsize) <= budget

    fitting = [d for d in nice if fits(d)]
    if not fitting:
        fitting = [d for d in divisors if fits(d)] or [min(divisors)]
    c_blk = max(fitting)

    # Only split for megacore chips; on 1-TC chips an extra grid step is pure overhead.
    if two_tensorcores and n == 1 and c_blk == c and c > 1:
        smaller = [d for d in divisors if d < c and fits(d)]
        if smaller:
            c_blk = max(smaller)
    return c_blk


# ----------------------------------- Pallas kernel ------------------------------------

def _adjust_kernel(x_ref, gh_ref, gw_ref, o_ref, *, compute_dtype, precision,
                   gather_h, gather_w, out_is_integer):
    # x_ref : (1, C_blk, H_in, W_in)   input block (full spatial plane per channel)
    # gh_ref: (H_f, H_in)              one-hot row selector    (resident, ~KiB)
    # gw_ref: (W_in, W_f)              one-hot column selector (resident, ~KiB)
    # o_ref : (1, C_blk, H_f, W_f)
    x = x_ref[0]
    if x.dtype != compute_dtype:
        x = x.astype(compute_dtype)
    c_blk = x.shape[0]

    if gather_h:
        # out[c, f, w] = x[c, hi[f], w] as a channel-batched one-hot contraction
        # over H_in.  Channels are the batch dim -> one dot_general, no transposes.
        gh = jnp.broadcast_to(gh_ref[...], (c_blk,) + gh_ref.shape)
        x = jax.lax.dot_general(
            gh, x,
            dimension_numbers=(((2,), (1,)), ((0,), (0,))),
            precision=precision,
            preferred_element_type=compute_dtype)

    if gather_w:
        # out[c, h, f] = x[c, h, wi[f]] as one large 2-D MXU matmul
        # (M = C_blk*H_f, K = W_in, N = W_f); result is already in output layout.
        c2, h_f, w_in = x.shape
        y = jnp.dot(x.reshape(c2 * h_f, w_in), gw_ref[...],
                    precision=precision, preferred_element_type=compute_dtype)
        x = y.reshape(c2, h_f, gw_ref.shape[1])

    if out_is_integer:
        x = jnp.rint(x)   # avoid truncation-toward-zero when casting back to ints
    o_ref[0] = x.astype(o_ref.dtype)


# -------------------------------------- module ----------------------------------------

class AdjustSizeLayer:
    """JAX/Pallas port of model/neck/adjust_size.py::AdjustSizeLayer (NCHW)."""

    def __init__(self, out_size):
        self.out_size = out_size

    def __call__(self, x: jnp.ndarray, crop: bool) -> jnp.ndarray:
        n, c, h_in, w_in = x.shape
        if isinstance(self.out_size, (tuple, list)):
            h_out, w_out = int(self.out_size[0]), int(self.out_size[1])
        else:
            h_out = w_out = int(self.out_size)

        # PyTorch derives the (negative) pad from the *width* and applies it to H and W.
        crop_amt = int((w_out - 7) / 2) if (crop and w_out > 7) else 0
        h_f, w_f = h_out - 2 * crop_amt, w_out - 2 * crop_amt
        if h_f <= 0 or w_f <= 0:
            raise ValueError(
                f"crop of {crop_amt} per side (derived from W_out={w_out}) leaves a "
                f"non-positive spatial size ({h_f}x{w_f}).")

        hi = _nearest_indices_np(h_out, h_in)
        wi = _nearest_indices_np(w_out, w_in)
        if crop_amt > 0:
            hi = hi[crop_amt:h_out - crop_amt]
            wi = wi[crop_amt:w_out - crop_amt]

        gather_h = not (h_f == h_in and np.array_equal(hi, np.arange(h_in)))
        gather_w = not (w_f == w_in and np.array_equal(wi, np.arange(w_in)))

        # Compute dtype / MXU precision (review: no unconditional HIGHEST).
        if x.dtype == jnp.bfloat16:
            compute_dtype, precision = jnp.bfloat16, jax.lax.Precision.DEFAULT
        elif x.dtype == jnp.float32:
            compute_dtype, precision = jnp.float32, jax.lax.Precision.HIGHEST
        else:
            # TODO(synk): int32 values with |x| > 2**24 lose precision through the f32
            # selection matmul; an exact wide-integer path would need select-based gather.
            compute_dtype, precision = jnp.float32, jax.lax.Precision.HIGHEST
        out_is_integer = bool(jnp.issubdtype(x.dtype, jnp.integer))

        # Tiny one-hot selectors (a few KiB): Gh picks output rows, Gw output columns.
        gh_np = np.zeros((h_f, h_in), dtype=np.float32)
        gh_np[np.arange(h_f), hi] = 1.0
        gw_np = np.zeros((w_in, w_f), dtype=np.float32)
        gw_np[wi, np.arange(w_f)] = 1.0
        gh = jnp.asarray(gh_np, dtype=compute_dtype)
        gw = jnp.asarray(gw_np, dtype=compute_dtype)

        vmem_capacity, two_tc = _tpu_vmem_and_megacore()
        in_itemsize = jnp.dtype(x.dtype).itemsize
        compute_itemsize = jnp.dtype(compute_dtype).itemsize
        c_blk = _choose_c_block(c, n, h_in, w_in, h_f, w_f,
                                in_itemsize, compute_itemsize, vmem_capacity, two_tc)

        needed = (_block_vmem_bytes(c_blk, h_in, w_in, h_f, w_f,
                                    in_itemsize, compute_itemsize)
                  + 2 * (gh_np.size + gw_np.size) * compute_itemsize
                  + (1 << 20))
        vmem_limit = int(min(0.9 * vmem_capacity, max(16 << 20, 1.5 * needed)))

        kernel = functools.partial(
            _adjust_kernel, compute_dtype=compute_dtype, precision=precision,
            gather_h=gather_h, gather_w=gather_w, out_is_integer=out_is_integer)

        out = pl.pallas_call(
            kernel,
            out_shape=jax.ShapeDtypeStruct((n, c, h_f, w_f), x.dtype),
            grid_spec=pltpu.PrefetchScalarGridSpec(
                num_scalar_prefetch=0,
                grid=(n, c // c_blk),
                in_specs=[
                    pl.BlockSpec((1, c_blk, h_in, w_in), lambda i, j: (i, j, 0, 0)),
                    pl.BlockSpec((h_f, h_in), lambda i, j: (0, 0)),   # resident, ~KiB
                    pl.BlockSpec((w_in, w_f), lambda i, j: (0, 0)),   # resident, ~KiB
                ],
                out_specs=pl.BlockSpec((1, c_blk, h_f, w_f), lambda i, j: (i, j, 0, 0)),
            ),
            compiler_params=pltpu.CompilerParams(
                dimension_semantics=("parallel", "parallel"),
                vmem_limit_bytes=vmem_limit,
            ),
        )(x, gh, gw)
        return out


# ------------------------------------- reference --------------------------------------

def _reference(x, out_h, out_w, crop):
    """Pure-JAX reference matching F.interpolate(mode='nearest') + negative F.pad."""
    hi = np.asarray(_nearest_indices_np(out_h, x.shape[2]))
    wi = np.asarray(_nearest_indices_np(out_w, x.shape[3]))
    y = x[:, :, hi, :][:, :, :, wi]
    if crop and out_w > 7:
        a = int((out_w - 7) / 2)
        y = y[:, :, a:out_h - a, a:out_w - a]
    return y


if __name__ == "__main__":
    key = jax.random.PRNGKey(0)
    # batch=2, channels=4, spatial 8x8 -> resized to 16x16 -> optionally cropped to 8x8.
    x = jax.random.normal(key, (2, 4, 8, 8), dtype=jnp.float32)
    layer = AdjustSizeLayer(out_size=16)

    out_crop = layer(x, crop=True)
    out_nocrop = layer(x, crop=False)
    jax.block_until_ready(out_crop)
    jax.block_until_ready(out_nocrop)

    ref_crop = _reference(x, 16, 16, True)
    ref_nocrop = _reference(x, 16, 16, False)
    assert out_crop.shape == ref_crop.shape == (2, 4, 8, 8)
    assert out_nocrop.shape == ref_nocrop.shape == (2, 4, 16, 16)
    assert jnp.allclose(out_crop, ref_crop, atol=1e-6)
    assert jnp.allclose(out_nocrop, ref_nocrop, atol=1e-6)

    # bf16 path exercises the DEFAULT-precision (single MXU pass) selection.
    xb = x.astype(jnp.bfloat16)
    out_b = layer(xb, crop=True)
    jax.block_until_ready(out_b)
    ref_b = _reference(xb, 16, 16, True)
    assert out_b.dtype == jnp.bfloat16 and out_b.shape == (2, 4, 8, 8)
    assert jnp.allclose(out_b.astype(jnp.float32), ref_b.astype(jnp.float32),
                        atol=1e-2, rtol=1e-2)

    print("KERNEL_OK")
</pallas_src>

<mosaic_0001>
module attributes {stable_mosaic.version = 11 : i64} {
  func.func @_adjust_kernel(%arg0: i32, %arg1: i32, %arg2: memref<1x4x8x8xf32, #tpu.memory_space<vmem>>, %arg3: memref<8x8xf32, #tpu.memory_space<vmem>>, %arg4: memref<8x8xf32, #tpu.memory_space<vmem>>, %arg5: memref<1x4x8x8xf32, #tpu.memory_space<vmem>>) attributes {dimension_semantics = [#tpu.dimension_semantics<parallel>, #tpu.dimension_semantics<parallel>], iteration_bounds = array<i64: 2, 1>, scalar_prefetch = 0 : i64, scratch_operands = 0 : i64, tpu.core_type = #tpu.core_type<tc>, window_params = [{transform_indices = @transform_0, window_bounds = array<i64: 1, 4, 8, 8>}, {pipeline_mode = #tpu.pipeline_mode<synchronous>, transform_indices = @transform_1, window_bounds = array<i64: 8, 8>}, {pipeline_mode = #tpu.pipeline_mode<synchronous>, transform_indices = @transform_2, window_bounds = array<i64: 8, 8>}, {transform_indices = @transform_3, window_bounds = array<i64: 1, 4, 8, 8>}]} {
    %c0 = arith.constant 0 : index
    %c0_0 = arith.constant 0 : index
    %c0_1 = arith.constant 0 : index
    %c0_2 = arith.constant 0 : index
    %0 = vector.load %arg2[%c0, %c0_0, %c0_1, %c0_2] : memref<1x4x8x8xf32, #tpu.memory_space<vmem>>, vector<1x4x8x8xf32>
    %1 = vector.shape_cast %0 : vector<1x4x8x8xf32> to vector<4x8x8xf32>
    %c0_3 = arith.constant 0 : index
    %c0_4 = arith.constant 0 : index
    %2 = vector.load %arg3[%c0_3, %c0_4] : memref<8x8xf32, #tpu.memory_space<vmem>>, vector<8x8xf32>
    %3 = vector.shape_cast %2 : vector<8x8xf32> to vector<1x8x8xf32>
    %4 = vector.broadcast %3 : vector<1x8x8xf32> to vector<4x8x8xf32>
    %cst = arith.constant dense<0.000000e+00> : vector<4x8x8xf32>
    %5 = tpu.matmul %4, %1, %cst {dimension_numbers = #tpu.dot_dimension_numbers<[2], [1], [1], [2], [0, 0, 0, 1, 1, 2], [0], [0]>, precision = #tpu.contract_precision<fp32>} : vector<4x8x8xf32>, vector<4x8x8xf32>, vector<4x8x8xf32> -> vector<4x8x8xf32>
    %6 = vector.shape_cast %5 : vector<4x8x8xf32> to vector<32x8xf32>
    %c0_5 = arith.constant 0 : index
    %c0_6 = arith.constant 0 : index
    %7 = vector.load %arg4[%c0_5, %c0_6] : memref<8x8xf32, #tpu.memory_space<vmem>>, vector<8x8xf32>
    %cst_7 = arith.constant dense<0.000000e+00> : vector<32x8xf32>
    %8 = tpu.matmul %6, %7, %cst_7 {dimension_numbers = #tpu.dot_dimension_numbers<[1], [0], [0], [1], [0, 0, 1, 1], [], []>, precision = #tpu.contract_precision<fp32>} : vector<32x8xf32>, vector<8x8xf32>, vector<32x8xf32> -> vector<32x8xf32>
    %9 = vector.shape_cast %8 : vector<32x8xf32> to vector<4x8x8xf32>
    %c0_8 = arith.constant 0 : index
    %c0_9 = arith.constant 0 : index
    %c0_10 = arith.constant 0 : index
    %c0_11 = arith.constant 0 : index
    %10 = vector.load %arg5[%c0_8, %c0_9, %c0_10, %c0_11] : memref<1x4x8x8xf32, #tpu.memory_space<vmem>>, vector<1x4x8x8xf32>
    %11 = vector.shape_cast %10 : vector<1x4x8x8xf32> to vector<4x8x8xf32>
    %12 = vector.shape_cast %9 : vector<4x8x8xf32> to vector<1x4x8x8xf32>
    tpu.vector_store %arg5[%c0_8, %c0_9, %c0_10, %c0_11], %12 {strides = array<i32>} : memref<1x4x8x8xf32, #tpu.memory_space<vmem>>, vector<1x4x8x8xf32>,
    return
  }
  func.func @transform_0(%arg0: i32, %arg1: i32) -> (i32, i32, i32, i32) {
    %c0_i32 = arith.constant 0 : i32
    %c0_i32_0 = arith.constant 0 : i32
    %c0_i32_1 = arith.constant 0 : i32
    return %arg0, %arg1, %c0_i32, %c0_i32_0 : i32, i32, i32, i32
  }
  func.func @transform_1(%arg0: i32, %arg1: i32) -> (i32, i32) {
    %c0_i32 = arith.constant 0 : i32
    %c0_i32_0 = arith.constant 0 : i32
    %c0_i32_1 = arith.constant 0 : i32
    return %c0_i32, %c0_i32_0 : i32, i32
  }
  func.func @transform_2(%arg0: i32, %arg1: i32) -> (i32, i32) {
    %c0_i32 = arith.constant 0 : i32
    %c0_i32_0 = arith.constant 0 : i32
    %c0_i32_1 = arith.constant 0 : i32
    return %c0_i32, %c0_i32_0 : i32, i32
  }
  func.func @transform_3(%arg0: i32, %arg1: i32) -> (i32, i32, i32, i32) {
    %c0_i32 = arith.constant 0 : i32
    %c0_i32_0 = arith.constant 0 : i32
    %c0_i32_1 = arith.constant 0 : i32
    return %arg0, %arg1, %c0_i32, %c0_i32_0 : i32, i32, i32, i32
  }
}

</mosaic_0001>

<llo_original>
// kernel: tpu_custom_call.1
$region0: #{tpu_custom_call.1}
  #allocation0 [shape = 'u32[]', space=smem, size = 0x4, offset = 0x4, fixed_abs, tag = 'smem constant byte address 0x4 - core index']
  #allocation1 [shape = 'u32[144,128]{1,0:T(1,128)}', space=vmem, size = 0x12000, scoped, tag = 'internal scratch']
  %s0 = inlined_call_operand.hbm [shape: f32[2,4,8,8], index: 0, kind: input, shape index: {}]
  %s1 = inlined_call_operand.hbm [shape: f32[8,8], index: 1, kind: input, shape index: {}]
  %s2 = inlined_call_operand.hbm [shape: f32[8,8], index: 2, kind: input, shape index: {}]
  %s3 = inlined_call_operand.hbm [shape: f32[2,4,8,8], index: 3, kind: output, shape index: {}]
  %s4 = sld [smem:[#allocation0]]
  $region57: #{tpu_custom_call.1} parent=0
    _
  %s6 = ssub.s32 1, %s4
  %s7 = scalar_select 0, %s6, %s4
  $region1: #{tpu_custom_call.1} parent=0
    #allocation2 [shape = 'u8[32768]{0}', space=vmem, size = 0x8000, scoped, tag = 'input window, operand 0']
    #allocation3 [shape = 's32[2]{0}', space=sflag, size = 0x8, scoped, tag = 'scoped memory for tpu_custom_call.1']
    #allocation4 [shape = 's32[2]{0}', space=sflag, size = 0x8, scoped, tag = 'scoped memory for tpu_custom_call.1']
    #allocation5 [shape = 'u8[4096]{0}', space=vmem, size = 0x1000, scoped, tag = 'input window, operand 1, single buffered']
    #allocation6 [shape = 's32[1]{0}', space=sflag, size = 0x4, scoped, tag = 'scoped memory for tpu_custom_call.1']
    #allocation7 [shape = 'u8[4096]{0}', space=vmem, size = 0x1000, scoped, tag = 'input window, operand 2, single buffered']
    #allocation8 [shape = 'u8[32768]{0}', space=vmem, size = 0x8000, scoped, tag = 'output window, operand 0']
    %8 = vsyncpa [#allocation3], 0
    %s9 = scalar_lea.sflag [#allocation3], 1
    %10 = vsyncpa %s9, 0
    %11 = vsyncpa [#allocation6], 0
    %12 = vsyncpa [#allocation4], 0
    %s13 = scalar_lea.sflag [#allocation4], 1
    %14 = vsyncpa %s13, 0
    loop: start=0, step=1, limit=4
    $region2: #{tpu_custom_call.1} parent=1 // loop_pre_header
      _
    $region3: #{tpu_custom_call.1} parent=1 // loop_header
      %s16 = sphi 0, %s20
      %p17 = scmp.ge.s32.totalorder %s16, 4
      %s23 = sphi 0, %s35
      %s24 = sphi 0, %s31
      %s25 = sphi 0, %s23
      %s26 = sphi 0, %s24
      %s27 = sphi 0, %s25
      %s28 = sphi 0, %s26
      %s40 = sphi 0, %s42
      %s43 = sphi 0, %s40
      %s44 = sphi 0, %s43
      %s60 = sphi 0, %s44
      %s64 = sphi 0, %s64
      %s66 = sphi 0, %s64
      %s67 = sphi 0, %s66
      %s81 = sphi 0, %s67
      %s85 = sphi 0, %s85
      %s87 = sphi 0, %s85
      %s88 = sphi 0, %s87
      %s102 = sphi 0, %s88
      %s110 = sphi 0, %s112
      %s113 = sphi 0, %s110
      %s114 = sphi 0, %s113
      %s130 = sphi 0, %s114
    $region4: #{tpu_custom_call.1} parent=1 // loop_header_branch
      %19 = sbr.rel (%p17) target = $region8
    $region5: #{tpu_custom_call.1} parent=1 // loop_body
      %s21 = ssub.s32 %s16, 1
      %s22 = ssub.s32 %s16, 2
      %s29 = sadd.s32 1, %s24
      %p30 = scmp.ge.s32.totalorder %s29, 1
      %s31 = scalar_select %p30, 0, %s29
      %s32 = sadd.s32 1, %s23
      %s33 = scalar_select %p30, %s32, %s23
      %p34 = scmp.ge.s32.totalorder %s33, 2
      %s35 = scalar_select %p34, 0, %s33
      %s36 = ssub.s32 %s23, %s35
      %s37 = ssub.s32 %s24, %s31
      %s38 = sor.u32 %s36, %s37
      %p39 = scmp.eq.s32.totalorder %s38, 0
      %s41 = sadd.s32 %s40, 1
      %s42 = scalar_select %p39, %s40, %s41
      %p45 = pneg %p39
      %p46 = scmp.eq.s32.totalorder %s16, 1
      %p47 = por %p45, %p46
      %p48 = scmp.ne.s32.totalorder %s40, %s43
      %p49 = scmp.eq.s32.totalorder %s16, 0
      %p50 = por %p48, %p49
      %p51 = scmp.ne.s32.totalorder %s40, %s43
      %p52 = scmp.eq.s32.totalorder %s21, 1
      %p53 = por %p51, %p52
      %p54 = scmp.ne.s32.totalorder %s43, %s44
      %p55 = scmp.eq.s32.totalorder %s21, 0
      %p56 = por %p54, %p55
      %p57 = scmp.ne.s32.totalorder %s43, %s44
      %p58 = scmp.eq.s32.totalorder %s22, 1
      %p59 = por %p57, %p58
      %p61 = scmp.ne.s32.totalorder %s44, %s60
      %p62 = scmp.eq.s32.totalorder %s22, 0
      %p63 = por %p61, %p62
      %s65 = sadd.s32 %s64, 1
      %p68 = scmp.eq.s32.totalorder %s16, 1
      %p69 = scmp.ne.s32.totalorder %s64, %s66
      %p70 = scmp.eq.s32.totalorder %s16, 0
      %p71 = por %p69, %p70
      %p72 = scmp.ne.s32.totalorder %s64, %s66
      %p73 = scmp.eq.s32.totalorder %s21, 1
      %p74 = por %p72, %p73
      %p75 = scmp.ne.s32.totalorder %s66, %s67
      %p76 = scmp.eq.s32.totalorder %s21, 0
      %p77 = por %p75, %p76
      %p78 = scmp.ne.s32.totalorder %s66, %s67
      %p79 = scmp.eq.s32.totalorder %s22, 1
      %p80 = por %p78, %p79
      %p82 = scmp.ne.s32.totalorder %s67, %s81
      %p83 = scmp.eq.s32.totalorder %s22, 0
      %p84 = por %p82, %p83
      %s86 = sadd.s32 %s85, 1
      %p89 = scmp.eq.s32.totalorder %s16, 1
      %p90 = scmp.ne.s32.totalorder %s85, %s87
      %p91 = scmp.eq.s32.totalorder %s16, 0
      %p92 = por %p90, %p91
      %p93 = scmp.ne.s32.totalorder %s85, %s87
      %p94 = scmp.eq.s32.totalorder %s21, 1
      %p95 = por %p93, %p94
      %p96 = scmp.ne.s32.totalorder %s87, %s88
      %p97 = scmp.eq.s32.totalorder %s21, 0
      %p98 = por %p96, %p97
      %p99 = scmp.ne.s32.totalorder %s87, %s88
      %p100 = scmp.eq.s32.totalorder %s22, 1
      %p101 = por %p99, %p100
      %p103 = scmp.ne.s32.totalorder %s88, %s102
      %p104 = scmp.eq.s32.totalorder %s22, 0
      %p105 = por %p103, %p104
      %s106 = ssub.s32 %s23, %s35
      %s107 = ssub.s32 %s24, %s31
      %s108 = sor.u32 %s106, %s107
      %p109 = scmp.eq.s32.totalorder %s108, 0
      %s111 = sadd.s32 %s110, 1
      %s112 = scalar_select %p109, %s110, %s111
      %p115 = pneg %p109
      %p116 = scmp.eq.s32.totalorder %s16, 1
      %p117 = por %p115, %p116
      %p118 = scmp.ne.s32.totalorder %s110, %s113
      %p119 = scmp.eq.s32.totalorder %s16, 0
      %p120 = por %p118, %p119
      %p121 = scmp.ne.s32.totalorder %s110, %s113
      %p122 = scmp.eq.s32.totalorder %s21, 1
      %p123 = por %p121, %p122
      %p124 = scmp.ne.s32.totalorder %s113, %s114
      %p125 = scmp.eq.s32.totalorder %s21, 0
      %p126 = por %p124, %p125
      %p127 = scmp.ne.s32.totalorder %s113, %s114
      %p128 = scmp.eq.s32.totalorder %s22, 1
      %p129 = por %p127, %p128
      %p131 = scmp.ne.s32.totalorder %s114, %s130
      %p132 = scmp.eq.s32.totalorder %s22, 0
      %p133 = por %p131, %p132
      %p134 = scmp.le.s32.totalorder 1, %s16
      %p135 = scmp.lt.s32.totalorder %s16, 3
      %p136 = pnand %p134, %p135
      %p137 = pneg %p136
      // Predicated region
      $region9: #{tpu_custom_call.1} parent=5 // pred_check
        _
      $region10: #{tpu_custom_call.1} parent=5 // pred_check_branch
        %139 = sbr.rel (%p136) target = $region12
      $region11: #{tpu_custom_call.1} parent=5 // pred_region
        %s140 = ssub.s32 %s16, 1
        // Predicated region
        $region13: #{tpu_custom_call.1} parent=11 // pred_check
          %p141 = pneg %p77
        $region14: #{tpu_custom_call.1} parent=11 // pred_check_branch
          %143 = sbr.rel (%p141) target = $region16
        $region15: #{tpu_custom_call.1} parent=11 // pred_region
          %s145 = ssub.s32 128, 128
          %146 = vsyncadd [#allocation6], %s145
          %s148 = sshll.u32 [#allocation5], 4
          %s149 = int_to_ptr.vmem [resolvable:$true] %s148
          %151 = dma.hbm_to_vmem [thread:$0]  %s1, 128, %s149, [#allocation6]
        $region16: #{tpu_custom_call.1} parent=11 // pred_fallthru
          _
        // Predicated region
        $region17: #{tpu_custom_call.1} parent=11 // pred_check
          %p152 = pneg %p98
        $region18: #{tpu_custom_call.1} parent=11 // pred_check_branch
          %154 = sbr.rel (%p152) target = $region20
        $region19: #{tpu_custom_call.1} parent=11 // pred_region
          %s156 = ssub.s32 128, 128
          %157 = vsyncadd [#allocation6], %s156
          %s159 = sshll.u32 [#allocation7], 4
          %s160 = int_to_ptr.vmem [resolvable:$true] %s159
          %162 = dma.hbm_to_vmem [thread:$0]  %s2, 128, %s160, [#allocation6]
        $region20: #{tpu_custom_call.1} parent=11 // pred_fallthru
          _
      $region12: #{tpu_custom_call.1} parent=5 // pred_fallthru
        _
      %p163 = scmp.lt.s32.totalorder %s16, 2
      // Predicated region
      $region21: #{tpu_custom_call.1} parent=5 // pred_check
        %p164 = pneg %p163
      $region22: #{tpu_custom_call.1} parent=5 // pred_check_branch
        %166 = sbr.rel (%p164) target = $region24
      $region23: #{tpu_custom_call.1} parent=5 // pred_region
        // Predicated region
        $region25: #{tpu_custom_call.1} parent=23 // pred_check
          %p167 = pneg %p50
        $region26: #{tpu_custom_call.1} parent=23 // pred_check_branch
          %169 = sbr.rel (%p167) target = $region28
        $region27: #{tpu_custom_call.1} parent=23 // pred_region
          %s170 = sand.u32 %s40, 1
          %s171 = scalar_lea.sflag [#allocation3], %s170
          %s172 = sand.u32 %s40, 1
          %s173 = smul.addr %s172, 32
          %s174 = scalar_lea.vmem [#allocation2], %s173
          %s175 = smul.u32 4, %s24
          %s177 = ssub.s32 512, 512
          %178 = vsyncadd %s171, %s177
          %s179 = smul.addr %s23, 4
          %s180 = sadd.s32 %s175, %s179
          %s181 = smul.addr %s180, 128
          %s182 = scalar_lea.hbm %s0, %s181
          %s183 = sshll.u32 %s174, 4
          %s184 = int_to_ptr.vmem [resolvable:$true] %s183
          %189 = dma.hbm_to_vmem [thread:$0]  %s182, 512, %s184, %s171, 128, 128, 8
        $region28: #{tpu_custom_call.1} parent=23 // pred_fallthru
          _
      $region24: #{tpu_custom_call.1} parent=5 // pred_fallthru
        _
      %p190 = scmp.le.s32.totalorder 1, %s16
      %p191 = scmp.lt.s32.totalorder %s16, 3
      %p192 = pnand %p190, %p191
      %p193 = pneg %p192
      // Predicated region
      $region29: #{tpu_custom_call.1} parent=5 // pred_check
        _
      $region30: #{tpu_custom_call.1} parent=5 // pred_check_branch
        %195 = sbr.rel (%p192) target = $region32
      $region31: #{tpu_custom_call.1} parent=5 // pred_region
        %s196 = ssub.s32 %s16, 1
        %s197 = sand.u32 %s43, 1
        %s198 = scalar_lea.sflag [#allocation3], %s197
        %s199 = sand.u32 %s43, 1
        %s200 = smul.addr %s199, 32
        %s201 = scalar_lea.vmem [#allocation2], %s200
        // Predicated region
        $region33: #{tpu_custom_call.1} parent=31 // pred_check
          %p202 = pneg %p56
        $region34: #{tpu_custom_call.1} parent=31 // pred_check_branch
          %204 = sbr.rel (%p202) target = $region36
        $region35: #{tpu_custom_call.1} parent=31 // pred_region
          %205 = dma.done %s198, 512
        $region36: #{tpu_custom_call.1} parent=31 // pred_fallthru
          _
        // Predicated region
        $region37: #{tpu_custom_call.1} parent=31 // pred_check
          %p206 = pneg %p77
        $region38: #{tpu_custom_call.1} parent=31 // pred_check_branch
          %208 = sbr.rel (%p206) target = $region40
        $region39: #{tpu_custom_call.1} parent=31 // pred_region
          %209 = dma.done [#allocation6], 128
        $region40: #{tpu_custom_call.1} parent=31 // pred_fallthru
          _
        // Predicated region
        $region41: #{tpu_custom_call.1} parent=31 // pred_check
          %p210 = pneg %p98
        $region42: #{tpu_custom_call.1} parent=31 // pred_check_branch
          %212 = sbr.rel (%p210) target = $region44
        $region43: #{tpu_custom_call.1} parent=31 // pred_region
          %213 = dma.done [#allocation6], 128
        $region44: #{tpu_custom_call.1} parent=31 // pred_fallthru
          _
        %s214 = sand.u32 %s43, 1
        %s215 = scalar_lea.sflag [#allocation3], %s214
        %s216 = sand.u32 %s43, 1
        %s217 = smul.addr %s216, 32
        %s218 = scalar_lea.vmem [#allocation2], %s217
        %p219 = pneg %p56
        %p220 = pneg %p53
        %p221 = pneg %p77
        %p222 = pneg %p74
        %p223 = pneg %p98
        %p224 = pneg %p95
        %p225 = pneg %p126
        %p226 = pneg %p123
        %s227 = sand.u32 %s113, 1
        %s228 = scalar_lea.sflag [#allocation4], %s227
        %s229 = sand.u32 %s113, 1
        %s230 = smul.addr %s229, 32
        %s231 = scalar_lea.vmem [#allocation8], %s230
        %s232 = smul.u32 4, %s26
        %s233 = smul.u32 4, %s26
        %v234 = vld [vmem:[%s201] sm:$0xff]
        %v235 = vld [vmem:[%s201 + $0x8] sm:$0xff]
        %v236 = vld [vmem:[%s201 + $0x10] sm:$0xff]
        %v237 = vld [vmem:[%s201 + $0x18] sm:$0xff]
        %v238 = vld [vmem:[#allocation5] sm:$0xff]
        %vm239 = vcmask 64512
        %v241 = vsel %vm239, %v238, 0
        %243 = vmatprep.subr.mxu0 0.0
        %v244 = vand.u32 %v234, 4294901760
        %245 = vmatpush1.msra.mxu0 %v244
        %246 = vmatprep.subr.mxu0 0.0
        %247 = vmatpush1.msra.mxu0 0.0
        %248 = vmatprep.subr.mxu0 0.0
        %249 = vmatpush1.msra.mxu0 0.0
        %250 = vmatprep.subr.mxu0 0.0
        %251 = vmatpush1.msra.mxu0 0.0
        %252 = vmatprep.subr.mxu0 0.0
        %253 = vmatpush1.msra.mxu0 0.0
        %254 = vmatprep.subr.mxu0 0.0
        %255 = vmatpush1.msra.mxu0 0.0
        %256 = vmatprep.subr.mxu0 0.0
        %257 = vmatpush1.msra.mxu0 0.0
        %258 = vmatprep.subr.mxu0 0.0
        %259 = vmatpush1.msra.mxu0 0.0
        %260 = vmatprep.subr.mxu0 0.0
        %261 = vmatpush1.msra.mxu0 0.0
        %262 = vmatprep.subr.mxu0 0.0
        %263 = vmatpush1.msra.mxu0 0.0
        %264 = vmatprep.subr.mxu0 0.0
        %265 = vmatpush1.msra.mxu0 0.0
        %266 = vmatprep.subr.mxu0 0.0
        %267 = vmatpush1.msra.mxu0 0.0
        %268 = vmatprep.subr.mxu0 0.0
        %269 = vmatpush1.msra.mxu0 0.0
        %270 = vmatprep.subr.mxu0 0.0
        %271 = vmatpush1.msra.mxu0 0.0
        %272 = vmatprep.subr.mxu0 0.0
        %273 = vmatpush1.msra.mxu0 0.0
        %274 = vmatprep.subr.mxu0 0.0
        %275 = vmatpush1.msra.mxu0 0.0
        %276 = vmatprep.subr.mxu0 0.0
        %277 = vmatpush1.msra.mxu0 0.0
        %278 = vmatprep.subr.mxu0 0.0
        %279 = vmatpush1.msra.mxu0 0.0
        %280 = vmatprep.subr.mxu0 0.0
        %281 = vmatpush1.msra.mxu0 0.0
        %282 = vmatprep.subr.mxu0 0.0
        %283 = vmatpush1.msra.mxu0 0.0
        %284 = vmatprep.subr.mxu0 0.0
        %285 = vmatpush1.msra.mxu0 0.0
        %286 = vmatprep.subr.mxu0 0.0
        %287 = vmatpush1.msra.mxu0 0.0
        %288 = vmatprep.subr.mxu0 0.0
        %289 = vmatpush1.msra.mxu0 0.0
        %290 = vmatprep.subr.mxu0 0.0
        %291 = vmatpush1.msra.mxu0 0.0
        %292 = vmatprep.subr.mxu0 0.0
        %293 = vmatpush1.msra.mxu0 0.0
        %294 = vmatprep.subr.mxu0 0.0
        %295 = vmatpush1.msra.mxu0 0.0
        %296 = vmatprep.subr.mxu0 0.0
        %297 = vmatpush1.msra.mxu0 0.0
        %298 = vmatprep.subr.mxu0 0.0
        %299 = vmatpush1.msra.mxu0 0.0
        %300 = vmatprep.subr.mxu0 0.0
        %301 = vmatpush1.msra.mxu0 0.0
        %302 = vmatprep.subr.mxu0 0.0
        %303 = vmatpush1.msra.mxu0 0.0
        %304 = vmatprep.subr.mxu0 0.0
        %305 = vmatpush1.msra.mxu0 0.0
        %306 = vmatprep.subr.mxu0 0.0
        %307 = vmatpush1.msra.mxu0 0.0
        %308 = vmatprep.mubr.f32.mxu0 0.0
        %v309 = vand.u32 %v241, 4294901760
        %v310 = vsub.f32 %v241, %v309
        %v311 = vand.u32 %v310, 4294901760
        %v312 = vsub.f32 %v310, %v311
        %v313 = vand.u32 %v312, 4294901760
        %314 = vmatmul.mubr.f32.gmra.mrb[0].mxu0 %v313
        %v315 = vpop.f32.mrb[0].mxu0
        %v316 = vadd.f32 0.0, %v315
        %v317 = vpop.f32.mrb[0].mxu0
        %318 = vdwg.mxu0
        %319 = vmatprep.subr.mxu0 0.0
        %v320 = vand.u32 %v234, 4294901760
        %v321 = vsub.f32 %v234, %v320
        %v322 = vand.u32 %v321, 4294901760
        %v323 = vsub.f32 %v321, %v322
        %v324 = vand.u32 %v323, 4294901760
        %325 = vmatpush1.msra.mxu0 %v324
        %326 = vmatprep.subr.mxu0 0.0
        %327 = vmatpush1.msra.mxu0 0.0
        %328 = vmatprep.subr.mxu0 0.0
        %329 = vmatpush1.msra.mxu0 0.0
        %330 = vmatprep.subr.mxu0 0.0
        %331 = vmatpush1.msra.mxu0 0.0
        %332 = vmatprep.subr.mxu0 0.0
        %333 = vmatpush1.msra.mxu0 0.0
        %334 = vmatprep.subr.mxu0 0.0
        %335 = vmatpush1.msra.mxu0 0.0
        %336 = vmatprep.subr.mxu0 0.0
        %337 = vmatpush1.msra.mxu0 0.0
        %338 = vmatprep.subr.mxu0 0.0
        %339 = vmatpush1.msra.mxu0 0.0
        %340 = vmatprep.subr.mxu0 0.0
        %341 = vmatpush1.msra.mxu0 0.0
        %342 = vmatprep.subr.mxu0 0.0
        %343 = vmatpush1.msra.mxu0 0.0
        %344 = vmatprep.subr.mxu0 0.0
        %345 = vmatpush1.msra.mxu0 0.0
        %346 = vmatprep.subr.mxu0 0.0
        %347 = vmatpush1.msra.mxu0 0.0
        %348 = vmatprep.subr.mxu0 0.0
        %349 = vmatpush1.msra.mxu0 0.0
        %350 = vmatprep.subr.mxu0 0.0
        %351 = vmatpush1.msra.mxu0 0.0
        %352 = vmatprep.subr.mxu0 0.0
        %353 = vmatpush1.msra.mxu0 0.0
        %354 = vmatprep.subr.mxu0 0.0
        %355 = vmatpush1.msra.mxu0 0.0
        %356 = vmatprep.subr.mxu0 0.0
        %357 = vmatpush1.msra.mxu0 0.0
        %358 = vmatprep.subr.mxu0 0.0
        %359 = vmatpush1.msra.mxu0 0.0
        %360 = vmatprep.subr.mxu0 0.0
        %361 = vmatpush1.msra.mxu0 0.0
        %362 = vmatprep.subr.mxu0 0.0
        %363 = vmatpush1.msra.mxu0 0.0
        %364 = vmatprep.subr.mxu0 0.0
        %365 = vmatpush1.msra.mxu0 0.0
        %366 = vmatprep.subr.mxu0 0.0
        %367 = vmatpush1.msra.mxu0 0.0
        %368 = vmatprep.subr.mxu0 0.0
        %369 = vmatpush1.msra.mxu0 0.0
        %370 = vmatprep.subr.mxu0 0.0
        %371 = vmatpush1.msra.mxu0 0.0
        %372 = vmatprep.subr.mxu0 0.0
        %373 = vmatpush1.msra.mxu0 0.0
        %374 = vmatprep.subr.mxu0 0.0
        %375 = vmatpush1.msra.mxu0 0.0
        %376 = vmatprep.subr.mxu0 0.0
        %377 = vmatpush1.msra.mxu0 0.0
        %378 = vmatprep.subr.mxu0 0.0
        %379 = vmatpush1.msra.mxu0 0.0
        %380 = vmatprep.subr.mxu0 0.0
        %381 = vmatpush1.msra.mxu0 0.0
        %382 = vmatprep.subr.mxu0 0.0
        %383 = vmatpush1.msra.mxu0 0.0
        %384 = vmatprep.subr.mxu0 0.0
        %385 = vmatpush1.msra.mxu0 0.0
        %386 = vmatprep.subr.mxu0 0.0
        %387 = vmatpush1.msra.mxu0 0.0
        %388 = vmatprep.mubr.f32.mxu0 0.0
        %v389 = vand.u32 %v241, 4294901760
        %390 = vmatmul.mubr.f32.gmra.mrb[0].mxu0 %v389
        %v391 = vpop.f32.mrb[0].mxu0
        %v392 = vadd.f32 %v316, %v391
        %v393 = vpop.f32.mrb[0].mxu0
        %394 = vdwg.mxu0
        %395 = vmatprep.subr.mxu0 0.0
        %v396 = vand.u32 %v234, 4294901760
        %v397 = vsub.f32 %v234, %v396
        %398 = vmatpush1.msra.mxu0 %v397
        %399 = vmatprep.subr.mxu0 0.0
        %400 = vmatpush1.msra.mxu0 0.0
        %401 = vmatprep.subr.mxu0 0.0
        %402 = vmatpush1.msra.mxu0 0.0
        %403 = vmatprep.subr.mxu0 0.0
        %404 = vmatpush1.msra.mxu0 0.0
        %405 = vmatprep.subr.mxu0 0.0
        %406 = vmatpush1.msra.mxu0 0.0
        %407 = vmatprep.subr.mxu0 0.0
        %408 = vmatpush1.msra.mxu0 0.0
        %409 = vmatprep.subr.mxu0 0.0
        %410 = vmatpush1.msra.mxu0 0.0
        %411 = vmatprep.subr.mxu0 0.0
        %412 = vmatpush1.msra.mxu0 0.0
        %413 = vmatprep.subr.mxu0 0.0
        %414 = vmatpush1.msra.mxu0 0.0
        %415 = vmatprep.subr.mxu0 0.0
        %416 = vmatpush1.msra.mxu0 0.0
        %417 = vmatprep.subr.mxu0 0.0
        %418 = vmatpush1.msra.mxu0 0.0
        %419 = vmatprep.subr.mxu0 0.0
        %420 = vmatpush1.msra.mxu0 0.0
        %421 = vmatprep.subr.mxu0 0.0
        %422 = vmatpush1.msra.mxu0 0.0
        %423 = vmatprep.subr.mxu0 0.0
        %424 = vmatpush1.msra.mxu0 0.0
        %425 = vmatprep.subr.mxu0 0.0
        %426 = vmatpush1.msra.mxu0 0.0
        %427 = vmatprep.subr.mxu0 0.0
        %428 = vmatpush1.msra.mxu0 0.0
        %429 = vmatprep.subr.mxu0 0.0
        %430 = vmatpush1.msra.mxu0 0.0
        %431 = vmatprep.subr.mxu0 0.0
        %432 = vmatpush1.msra.mxu0 0.0
        %433 = vmatprep.subr.mxu0 0.0
        %434 = vmatpush1.msra.mxu0 0.0
        %435 = vmatprep.subr.mxu0 0.0
        %436 = vmatpush1.msra.mxu0 0.0
        %437 = vmatprep.subr.mxu0 0.0
        %438 = vmatpush1.msra.mxu0 0.0
        %439 = vmatprep.subr.mxu0 0.0
        %440 = vmatpush1.msra.mxu0 0.0
        %441 = vmatprep.subr.mxu0 0.0
        %442 = vmatpush1.msra.mxu0 0.0
        %443 = vmatprep.subr.mxu0 0.0
        %444 = vmatpush1.msra.mxu0 0.0
        %445 = vmatprep.subr.mxu0 0.0
        %446 = vmatpush1.msra.mxu0 0.0
        %447 = vmatprep.subr.mxu0 0.0
        %448 = vmatpush1.msra.mxu0 0.0
        %449 = vmatprep.subr.mxu0 0.0
        %450 = vmatpush1.msra.mxu0 0.0
        %451 = vmatprep.subr.mxu0 0.0
        %452 = vmatpush1.msra.mxu0 0.0
        %453 = vmatprep.subr.mxu0 0.0
        %454 = vmatpush1.msra.mxu0 0.0
        %455 = vmatprep.subr.mxu0 0.0
        %456 = vmatpush1.msra.mxu0 0.0
        %457 = vmatprep.subr.mxu0 0.0
        %458 = vmatpush1.msra.mxu0 0.0
        %459 = vmatprep.subr.mxu0 0.0
        %460 = vmatpush1.msra.mxu0 0.0
        %461 = vmatprep.mubr.f32.mxu0 0.0
        %v462 = vand.u32 %v241, 4294901760
        %v463 = vsub.f32 %v241, %v462
        %464 = vmatmul.mubr.f32.gmra.mrb[0].mxu0 %v463
        %v465 = vpop.f32.mrb[0].mxu0
        %v466 = vadd.f32 %v392, %v465
        %v467 = vpop.f32.mrb[0].mxu0
        %468 = vdwg.mxu0
        %469 = vmatprep.subr.mxu0 0.0
        %v470 = vand.u32 %v234, 4294901760
        %471 = vmatpush1.msra.mxu0 %v470
        %472 = vmatprep.subr.mxu0 0.0
        %473 = vmatpush1.msra.mxu0 0.0
        %474 = vmatprep.subr.mxu0 0.0
        %475 = vmatpush1.msra.mxu0 0.0
        %476 = vmatprep.subr.mxu0 0.0
        %477 = vmatpush1.msra.mxu0 0.0
        %478 = vmatprep.subr.mxu0 0.0
        %479 = vmatpush1.msra.mxu0 0.0
        %480 = vmatprep.subr.mxu0 0.0
        %481 = vmatpush1.msra.mxu0 0.0
        %482 = vmatprep.subr.mxu0 0.0
        %483 = vmatpush1.msra.mxu0 0.0
        %484 = vmatprep.subr.mxu0 0.0
        %485 = vmatpush1.msra.mxu0 0.0
        %486 = vmatprep.subr.mxu0 0.0
        %487 = vmatpush1.msra.mxu0 0.0
        %488 = vmatprep.subr.mxu0 0.0
        %489 = vmatpush1.msra.mxu0 0.0
        %490 = vmatprep.subr.mxu0 0.0
        %491 = vmatpush1.msra.mxu0 0.0
        %492 = vmatprep.subr.mxu0 0.0
        %493 = vmatpush1.msra.mxu0 0.0
        %494 = vmatprep.subr.mxu0 0.0
        %495 = vmatpush1.msra.mxu0 0.0
        %496 = vmatprep.subr.mxu0 0.0
        %497 = vmatpush1.msra.mxu0 0.0
        %498 = vmatprep.subr.mxu0 0.0
        %499 = vmatpush1.msra.mxu0 0.0
        %500 = vmatprep.subr.mxu0 0.0
        %501 = vmatpush1.msra.mxu0 0.0
        %502 = vmatprep.subr.mxu0 0.0
        %503 = vmatpush1.msra.mxu0 0.0
        %504 = vmatprep.subr.mxu0 0.0
        %505 = vmatpush1.msra.mxu0 0.0
        %506 = vmatprep.subr.mxu0 0.0
        %507 = vmatpush1.msra.mxu0 0.0
        %508 = vmatprep.subr.mxu0 0.0
        %509 = vmatpush1.msra.mxu0 0.0
        %510 = vmatprep.subr.mxu0 0.0
        %511 = vmatpush1.msra.mxu0 0.0
        %512 = vmatprep.subr.mxu0 0.0
        %513 = vmatpush1.msra.mxu0 0.0
        %514 = vmatprep.subr.mxu0 0.0
        %515 = vmatpush1.msra.mxu0 0.0
        %516 = vmatprep.subr.mxu0 0.0
        %517 = vmatpush1.msra.mxu0 0.0
        %518 = vmatprep.subr.mxu0 0.0
        %519 = vmatpush1.msra.mxu0 0.0
        %520 = vmatprep.subr.mxu0 0.0
        %521 = vmatpush1.msra.mxu0 0.0
        %522 = vmatprep.subr.mxu0 0.0
        %523 = vmatpush1.msra.mxu0 0.0
        %524 = vmatprep.subr.mxu0 0.0
        %525 = vmatpush1.msra.mxu0 0.0
        %526 = vmatprep.subr.mxu0 0.0
        %527 = vmatpush1.msra.mxu0 0.0
        %528 = vmatprep.subr.mxu0 0.0
        %529 = vmatpush1.msra.mxu0 0.0
        %530 = vmatprep.subr.mxu0 0.0
        %531 = vmatpush1.msra.mxu0 0.0
        %532 = vmatprep.subr.mxu0 0.0
        %533 = vmatpush1.msra.mxu0 0.0
        %534 = vmatprep.mubr.f32.mxu0 0.0
        %v535 = vand.u32 %v241, 4294901760
        %v536 = vsub.f32 %v241, %v535
        %v537 = vand.u32 %v536, 4294901760
        %538 = vmatmul.mubr.f32.gmra.mrb[0].mxu0 %v537
        %v539 = vpop.f32.mrb[0].mxu0
        %v540 = vadd.f32 %v466, %v539
        %v541 = vpop.f32.mrb[0].mxu0
        %542 = vdwg.mxu0
        %543 = vmatprep.subr.mxu0 0.0
        %v544 = vand.u32 %v234, 4294901760
        %v545 = vsub.f32 %v234, %v544
        %v546 = vand.u32 %v545, 4294901760
        %547 = vmatpush1.msra.mxu0 %v546
        %548 = vmatprep.subr.mxu0 0.0
        %549 = vmatpush1.msra.mxu0 0.0
        %550 = vmatprep.subr.mxu0 0.0
        %551 = vmatpush1.msra.mxu0 0.0
        %552 = vmatprep.subr.mxu0 0.0
        %553 = vmatpush1.msra.mxu0 0.0
        %554 = vmatprep.subr.mxu0 0.0
        %555 = vmatpush1.msra.mxu0 0.0
        %556 = vmatprep.subr.mxu0 0.0
        %557 = vmatpush1.msra.mxu0 0.0
        %558 = vmatprep.subr.mxu0 0.0
        %559 = vmatpush1.msra.mxu0 0.0
        %560 = vmatprep.subr.mxu0 0.0
        %561 = vmatpush1.msra.mxu0 0.0
        %562 = vmatprep.subr.mxu0 0.0
        %563 = vmatpush1.msra.mxu0 0.0
        %564 = vmatprep.subr.mxu0 0.0
        %565 = vmatpush1.msra.mxu0 0.0
        %566 = vmatprep.subr.mxu0 0.0
        %567 = vmatpush1.msra.mxu0 0.0
        %568 = vmatprep.subr.mxu0 0.0
        %569 = vmatpush1.msra.mxu0 0.0
        %570 = vmatprep.subr.mxu0 0.0
        %571 = vmatpush1.msra.mxu0 0.0
        %572 = vmatprep.subr.mxu0 0.0
        %573 = vmatpush1.msra.mxu0 0.0
        %574 = vmatprep.subr.mxu0 0.0
        %575 = vmatpush1.msra.mxu0 0.0
        %576 = vmatprep.subr.mxu0 0.0
        %577 = vmatpush1.msra.mxu0 0.0
        %578 = vmatprep.subr.mxu0 0.0
        %579 = vmatpush1.msra.mxu0 0.0
        %580 = vmatprep.subr.mxu0 0.0
        %581 = vmatpush1.msra.mxu0 0.0
        %582 = vmatprep.subr.mxu0 0.0
        %583 = vmatpush1.msra.mxu0 0.0
        %584 = vmatprep.subr.mxu0 0.0
        %585 = vmatpush1.msra.mxu0 0.0
        %586 = vmatprep.subr.mxu0 0.0
        %587 = vmatpush1.msra.mxu0 0.0
        %588 = vmatprep.subr.mxu0 0.0
        %589 = vmatpush1.msra.mxu0 0.0
        %590 = vmatprep.subr.mxu0 0.0
        %591 = vmatpush1.msra.mxu0 0.0
        %592 = vmatprep.subr.mxu0 0.0
        %593 = vmatpush1.msra.mxu0 0.0
        %594 = vmatprep.subr.mxu0 0.0
        %595 = vmatpush1.msra.mxu0 0.0
        %596 = vmatprep.subr.mxu0 0.0
        %597 = vmatpush1.msra.mxu0 0.0
        %598 = vmatprep.subr.mxu0 0.0
        %599 = vmatpush1.msra.mxu0 0.0
        %600 = vmatprep.subr.mxu0 0.0
        %601 = vmatpush1.msra.mxu0 0.0
        %602 = vmatprep.subr.mxu0 0.0
        %603 = vmatpush1.msra.mxu0 0.0
        %604 = vmatprep.subr.mxu0 0.0
        %605 = vmatpush1.msra.mxu0 0.0
        %606 = vmatprep.subr.mxu0 0.0
        %607 = vmatpush1.msra.mxu0 0.0
        %608 = vmatprep.subr.mxu0 0.0
        %609 = vmatpush1.msra.mxu0 0.0
        %610 = vmatprep.mubr.f32.mxu0 0.0
        %v611 = vand.u32 %v241, 4294901760
        %612 = vmatmul.mubr.f32.gmra.mrb[0].mxu0 %v611
        %v613 = vpop.f32.mrb[0].mxu0
        %v614 = vadd.f32 %v540, %v613
        %v615 = vpop.f32.mrb[0].mxu0
        %616 = vdwg.mxu0
        %617 = vmatprep.subr.mxu0 0.0
        %v618 = vand.u32 %v234, 4294901760
        %619 = vmatpush1.msra.mxu0 %v618
        %620 = vmatprep.subr.mxu0 0.0
        %621 = vmatpush1.msra.mxu0 0.0
        %622 = vmatprep.subr.mxu0 0.0
        %623 = vmatpush1.msra.mxu0 0.0
        %624 = vmatprep.subr.mxu0 0.0
        %625 = vmatpush1.msra.mxu0 0.0
        %626 = vmatprep.subr.mxu0 0.0
        %627 = vmatpush1.msra.mxu0 0.0
        %628 = vmatprep.subr.mxu0 0.0
        %629 = vmatpush1.msra.mxu0 0.0
        %630 = vmatprep.subr.mxu0 0.0
        %631 = vmatpush1.msra.mxu0 0.0
        %632 = vmatprep.subr.mxu0 0.0
        %633 = vmatpush1.msra.mxu0 0.0
        %634 = vmatprep.subr.mxu0 0.0
        %635 = vmatpush1.msra.mxu0 0.0
        %636 = vmatprep.subr.mxu0 0.0
        %637 = vmatpush1.msra.mxu0 0.0
        %638 = vmatprep.subr.mxu0 0.0
        %639 = vmatpush1.msra.mxu0 0.0
        %640 = vmatprep.subr.mxu0 0.0
        %641 = vmatpush1.msra.mxu0 0.0
        %642 = vmatprep.subr.mxu0 0.0
        %643 = vmatpush1.msra.mxu0 0.0
        %644 = vmatprep.subr.mxu0 0.0
        %645 = vmatpush1.msra.mxu0 0.0
        %646 = vmatprep.subr.mxu0 0.0
        %647 = vmatpush1.msra.mxu0 0.0
        %648 = vmatprep.subr.mxu0 0.0
        %649 = vmatpush1.msra.mxu0 0.0
        %650 = vmatprep.subr.mxu0 0.0
        %651 = vmatpush1.msra.mxu0 0.0
        %652 = vmatprep.subr.mxu0 0.0
        %653 = vmatpush1.msra.mxu0 0.0
        %654 = vmatprep.subr.mxu0 0.0
        %655 = vmatpush1.msra.mxu0 0.0
        %656 = vmatprep.subr.mxu0 0.0
        %657 = vmatpush1.msra.mxu0 0.0
        %658 = vmatprep.subr.mxu0 0.0
        %659 = vmatpush1.msra.mxu0 0.0
        %660 = vmatprep.subr.mxu0 0.0
        %661 = vmatpush1.msra.mxu0 0.0
        %662 = vmatprep.subr.mxu0 0.0
        %663 = vmatpush1.msra.mxu0 0.0
        %664 = vmatprep.subr.mxu0 0.0
        %665 = vmatpush1.msra.mxu0 0.0
        %666 = vmatprep.subr.mxu0 0.0
        %667 = vmatpush1.msra.mxu0 0.0
        %668 = vmatprep.subr.mxu0 0.0
        %669 = vmatpush1.msra.mxu0 0.0
        %670 = vmatprep.subr.mxu0 0.0
        %671 = vmatpush1.msra.mxu0 0.0
        %672 = vmatprep.subr.mxu0 0.0
        %673 = vmatpush1.msra.mxu0 0.0
        %674 = vmatprep.subr.mxu0 0.0
        %675 = vmatpush1.msra.mxu0 0.0
        %676 = vmatprep.subr.mxu0 0.0
        %677 = vmatpush1.msra.mxu0 0.0
        %678 = vmatprep.subr.mxu0 0.0
        %679 = vmatpush1.msra.mxu0 0.0
        %680 = vmatprep.subr.mxu0 0.0
        %681 = vmatpush1.msra.mxu0 0.0
        %682 = vmatprep.mubr.f32.mxu0 0.0
        %v683 = vand.u32 %v241, 4294901760
        %684 = vmatmul.mubr.f32.gmra.mrb[0].mxu0 %v683
        %v685 = vpop.f32.mrb[0].mxu0
        %v686 = vadd.f32 %v614, %v685
        %v687 = vpop.f32.mrb[0].mxu0
        %688 = vdwg.mxu0
        %689 = vmatprep.subr.mxu0 0.0
        %v690 = vand.u32 %v235, 4294901760
        %691 = vmatpush1.msra.mxu0 %v690
        %692 = vmatprep.subr.mxu0 0.0
        %693 = vmatpush1.msra.mxu0 0.0
        %694 = vmatprep.subr.mxu0 0.0
        %695 = vmatpush1.msra.mxu0 0.0
        %696 = vmatprep.subr.mxu0 0.0
        %697 = vmatpush1.msra.mxu0 0.0
        %698 = vmatprep.subr.mxu0 0.0
        %699 = vmatpush1.msra.mxu0 0.0
        %700 = vmatprep.subr.mxu0 0.0
        %701 = vmatpush1.msra.mxu0 0.0
        %702 = vmatprep.subr.mxu0 0.0
        %703 = vmatpush1.msra.mxu0 0.0
        %704 = vmatprep.subr.mxu0 0.0
        %705 = vmatpush1.msra.mxu0 0.0
        %706 = vmatprep.subr.mxu0 0.0
        %707 = vmatpush1.msra.mxu0 0.0
        %708 = vmatprep.subr.mxu0 0.0
        %709 = vmatpush1.msra.mxu0 0.0
        %710 = vmatprep.subr.mxu0 0.0
        %711 = vmatpush1.msra.mxu0 0.0
        %712 = vmatprep.subr.mxu0 0.0
        %713 = vmatpush1.msra.mxu0 0.0
        %714 = vmatprep.subr.mxu0 0.0
        %715 = vmatpush1.msra.mxu0 0.0
        %716 = vmatprep.subr.mxu0 0.0
        %717 = vmatpush1.msra.mxu0 0.0
        %718 = vmatprep.subr.mxu0 0.0
        %719 = vmatpush1.msra.mxu0 0.0
        %720 = vmatprep.subr.mxu0 0.0
        %721 = vmatpush1.msra.mxu0 0.0
        %722 = vmatprep.subr.mxu0 0.0
        %723 = vmatpush1.msra.mxu0 0.0
        %724 = vmatprep.subr.mxu0 0.0
        %725 = vmatpush1.msra.mxu0 0.0
        %726 = vmatprep.subr.mxu0 0.0
        %727 = vmatpush1.msra.mxu0 0.0
        %728 = vmatprep.subr.mxu0 0.0
        %729 = vmatpush1.msra.mxu0 0.0
        %730 = vmatprep.subr.mxu0 0.0
        %731 = vmatpush1.msra.mxu0 0.0
        %732 = vmatprep.subr.mxu0 0.0
        %733 = vmatpush1.msra.mxu0 0.0
        %734 = vmatprep.subr.mxu0 0.0
        %735 = vmatpush1.msra.mxu0 0.0
        %736 = vmatprep.subr.mxu0 0.0
        %737 = vmatpush1.msra.mxu0 0.0
        %738 = vmatprep.subr.mxu0 0.0
        %739 = vmatpush1.msra.mxu0 0.0
        %740 = vmatprep.subr.mxu0 0.0
        %741 = vmatpush1.msra.mxu0 0.0
        %742 = vmatprep.subr.mxu0 0.0
        %743 = vmatpush1.msra.mxu0 0.0
        %744 = vmatprep.subr.mxu0 0.0
        %745 = vmatpush1.msra.mxu0 0.0
        %746 = vmatprep.subr.mxu0 0.0
        %747 = vmatpush1.msra.mxu0 0.0
        %748 = vmatprep.subr.mxu0 0.0
        %749 = vmatpush1.msra.mxu0 0.0
        %750 = vmatprep.subr.mxu0 0.0
        %751 = vmatpush1.msra.mxu0 0.0
        %752 = vmatprep.subr.mxu0 0.0
        %753 = vmatpush1.msra.mxu0 0.0
        %754 = vmatprep.mubr.f32.mxu0 0.0
        %v755 = vand.u32 %v241, 4294901760
        %v756 = vsub.f32 %v241, %v755
        %v757 = vand.u32 %v756, 4294901760
        %v758 = vsub.f32 %v756, %v757
        %v759 = vand.u32 %v758, 4294901760
        %760 = vmatmul.mubr.f32.gmra.mrb[0].mxu0 %v759
        %v761 = vpop.f32.mrb[0].mxu0
        %v762 = vadd.f32 0.0, %v761
        %v763 = vpop.f32.mrb[0].mxu0
        %764 = vdwg.mxu0
        %765 = vmatprep.subr.mxu0 0.0
        %v766 = vand.u32 %v235, 4294901760
        %v767 = vsub.f32 %v235, %v766
        %v768 = vand.u32 %v767, 4294901760
        %v769 = vsub.f32 %v767, %v768
        %v770 = vand.u32 %v769, 4294901760
        %771 = vmatpush1.msra.mxu0 %v770
        %772 = vmatprep.subr.mxu0 0.0
        %773 = vmatpush1.msra.mxu0 0.0
        %774 = vmatprep.subr.mxu0 0.0
        %775 = vmatpush1.msra.mxu0 0.0
        %776 = vmatprep.subr.mxu0 0.0
        %777 = vmatpush1.msra.mxu0 0.0
        %778 = vmatprep.subr.mxu0 0.0
        %779 = vmatpush1.msra.mxu0 0.0
        %780 = vmatprep.subr.mxu0 0.0
        %781 = vmatpush1.msra.mxu0 0.0
        %782 = vmatprep.subr.mxu0 0.0
        %783 = vmatpush1.msra.mxu0 0.0
        %784 = vmatprep.subr.mxu0 0.0
        %785 = vmatpush1.msra.mxu0 0.0
        %786 = vmatprep.subr.mxu0 0.0
        %787 = vmatpush1.msra.mxu0 0.0
        %788 = vmatprep.subr.mxu0 0.0
        %789 = vmatpush1.msra.mxu0 0.0
        %790 = vmatprep.subr.mxu0 0.0
        %791 = vmatpush1.msra.mxu0 0.0
        %792 = vmatprep.subr.mxu0 0.0
        %793 = vmatpush1.msra.mxu0 0.0
        %794 = vmatprep.subr.mxu0 0.0
        %795 = vmatpush1.msra.mxu0 0.0
        %796 = vmatprep.subr.mxu0 0.0
        %797 = vmatpush1.msra.mxu0 0.0
        %798 = vmatprep.subr.mxu0 0.0
        %799 = vmatpush1.msra.mxu0 0.0
        %800 = vmatprep.subr.mxu0 0.0
        %801 = vmatpush1.msra.mxu0 0.0
        %802 = vmatprep.subr.mxu0 0.0
        %803 = vmatpush1.msra.mxu0 0.0
        %804 = vmatprep.subr.mxu0 0.0
        %805 = vmatpush1.msra.mxu0 0.0
        %806 = vmatprep.subr.mxu0 0.0
        %807 = vmatpush1.msra.mxu0 0.0
        %808 = vmatprep.subr.mxu0 0.0
        %809 = vmatpush1.msra.mxu0 0.0
        %810 = vmatprep.subr.mxu0 0.0
        %811 = vmatpush1.msra.mxu0 0.0
        %812 = vmatprep.subr.mxu0 0.0
        %813 = vmatpush1.msra.mxu0 0.0
        %814 = vmatprep.subr.mxu0 0.0
        %815 = vmatpush1.msra.mxu0 0.0
        %816 = vmatprep.subr.mxu0 0.0
        %817 = vmatpush1.msra.mxu0 0.0
        %818 = vmatprep.subr.mxu0 0.0
        %819 = vmatpush1.msra.mxu0 0.0
        %820 = vmatprep.subr.mxu0 0.0
        %821 = vmatpush1.msra.mxu0 0.0
        %822 = vmatprep.subr.mxu0 0.0
        %823 = vmatpush1.msra.mxu0 0.0
        %824 = vmatprep.subr.mxu0 0.0
        %825 = vmatpush1.msra.mxu0 0.0
        %826 = vmatprep.subr.mxu0 0.0
        %827 = vmatpush1.msra.mxu0 0.0
        %828 = vmatprep.subr.mxu0 0.0
        %829 = vmatpush1.msra.mxu0 0.0
        %830 = vmatprep.subr.mxu0 0.0
        %831 = vmatpush1.msra.mxu0 0.0
        %832 = vmatprep.subr.mxu0 0.0
        %833 = vmatpush1.msra.mxu0 0.0
        %834 = vmatprep.mubr.f32.mxu0 0.0
        %v835 = vand.u32 %v241, 4294901760
        %836 = vmatmul.mubr.f32.gmra.mrb[0].mxu0 %v835
        %v837 = vpop.f32.mrb[0].mxu0
        %v838 = vadd.f32 %v762, %v837
        %v839 = vpop.f32.mrb[0].mxu0
        %840 = vdwg.mxu0
        %841 = vmatprep.subr.mxu0 0.0
        %v842 = vand.u32 %v235, 4294901760
        %v843 = vsub.f32 %v235, %v842
        %844 = vmatpush1.msra.mxu0 %v843
        %845 = vmatprep.subr.mxu0 0.0
        %846 = vmatpush1.msra.mxu0 0.0
        %847 = vmatprep.subr.mxu0 0.0
        %848 = vmatpush1.msra.mxu0 0.0
        %849 = vmatprep.subr.mxu0 0.0
        %850 = vmatpush1.msra.mxu0 0.0
        %851 = vmatprep.subr.mxu0 0.0
        %852 = vmatpush1.msra.mxu0 0.0
        %853 = vmatprep.subr.mxu0 0.0
        %854 = vmatpush1.msra.mxu0 0.0
        %855 = vmatprep.subr.mxu0 0.0
        %856 = vmatpush1.msra.mxu0 0.0
        %857 = vmatprep.subr.mxu0 0.0
        %858 = vmatpush1.msra.mxu0 0.0
        %859 = vmatprep.subr.mxu0 0.0
        %860 = vmatpush1.msra.mxu0 0.0
        %861 = vmatprep.subr.mxu0 0.0
        %862 = vmatpush1.msra.mxu0 0.0
        %863 = vmatprep.subr.mxu0 0.0
        %864 = vmatpush1.msra.mxu0 0.0
        %865 = vmatprep.subr.mxu0 0.0
        %866 = vmatpush1.msra.mxu0 0.0
        %867 = vmatprep.subr.mxu0 0.0
        %868 = vmatpush1.msra.mxu0 0.0
        %869 = vmatprep.subr.mxu0 0.0
        %870 = vmatpush1.msra.mxu0 0.0
        %871 = vmatprep.subr.mxu0 0.0
        %872 = vmatpush1.msra.mxu0 0.0
        %873 = vmatprep.subr.mxu0 0.0
        %874 = vmatpush1.msra.mxu0 0.0
        %875 = vmatprep.subr.mxu0 0.0
        %876 = vmatpush1.msra.mxu0 0.0
        %877 = vmatprep.subr.mxu0 0.0
        %878 = vmatpush1.msra.mxu0 0.0
        %879 = vmatprep.subr.mxu0 0.0
        %880 = vmatpush1.msra.mxu0 0.0
        %881 = vmatprep.subr.mxu0 0.0
        %882 = vmatpush1.msra.mxu0 0.0
        %883 = vmatprep.subr.mxu0 0.0
        %884 = vmatpush1.msra.mxu0 0.0
        %885 = vmatprep.subr.mxu0 0.0
        %886 = vmatpush1.msra.mxu0 0.0
        %887 = vmatprep.subr.mxu0 0.0
        %888 = vmatpush1.msra.mxu0 0.0
        %889 = vmatprep.subr.mxu0 0.0
        %890 = vmatpush1.msra.mxu0 0.0
        %891 = vmatprep.subr.mxu0 0.0
        %892 = vmatpush1.msra.mxu0 0.0
        %893 = vmatprep.subr.mxu0 0.0
        %894 = vmatpush1.msra.mxu0 0.0
        %895 = vmatprep.subr.mxu0 0.0
        %896 = vmatpush1.msra.mxu0 0.0
        %897 = vmatprep.subr.mxu0 0.0
        %898 = vmatpush1.msra.mxu0 0.0
        %899 = vmatprep.subr.mxu0 0.0
        %900 = vmatpush1.msra.mxu0 0.0
        %901 = vmatprep.subr.mxu0 0.0
        %902 = vmatpush1.msra.mxu0 0.0
        %903 = vmatprep.subr.mxu0 0.0
        %904 = vmatpush1.msra.mxu0 0.0
        %905 = vmatprep.subr.mxu0 0.0
        %906 = vmatpush1.msra.mxu0 0.0
        %907 = vmatprep.mubr.f32.mxu0 0.0
        %v908 = vand.u32 %v241, 4294901760
        %v909 = vsub.f32 %v241, %v908
        %910 = vmatmul.mubr.f32.gmra.mrb[0].mxu0 %v909
        %v911 = vpop.f32.mrb[0].mxu0
        %v912 = vadd.f32 %v838, %v911
        %v913 = vpop.f32.mrb[0].mxu0
        %914 = vdwg.mxu0
        %915 = vmatprep.subr.mxu0 0.0
        %v916 = vand.u32 %v235, 4294901760
        %917 = vmatpush1.msra.mxu0 %v916
        %918 = vmatprep.subr.mxu0 0.0
        %919 = vmatpush1.msra.mxu0 0.0
        %920 = vmatprep.subr.mxu0 0.0
        %921 = vmatpush1.msra.mxu0 0.0
        %922 = vmatprep.subr.mxu0 0.0
        %923 = vmatpush1.msra.mxu0 0.0
        %924 = vmatprep.subr.mxu0 0.0
        %925 = vmatpush1.msra.mxu0 0.0
        %926 = vmatprep.subr.mxu0 0.0
        %927 = vmatpush1.msra.mxu0 0.0
        %928 = vmatprep.subr.mxu0 0.0
        %929 = vmatpush1.msra.mxu0 0.0
        %930 = vmatprep.subr.mxu0 0.0
        %931 = vmatpush1.msra.mxu0 0.0
        %932 = vmatprep.subr.mxu0 0.0
        %933 = vmatpush1.msra.mxu0 0.0
        %934 = vmatprep.subr.mxu0 0.0
        %935 = vmatpush1.msra.mxu0 0.0
        %936 = vmatprep.subr.mxu0 0.0
        %937 = vmatpush1.msra.mxu0 0.0
        %938 = vmatprep.subr.mxu0 0.0
        %939 = vmatpush1.msra.mxu0 0.0
        %940 = vmatprep.subr.mxu0 0.0
        %941 = vmatpush1.msra.mxu0 0.0
        %942 = vmatprep.subr.mxu0 0.0
        %943 = vmatpush1.msra.mxu0 0.0
        %944 = vmatprep.subr.mxu0 0.0
        %945 = vmatpush1.msra.mxu0 0.0
        %946 = vmatprep.subr.mxu0 0.0
        %947 = vmatpush1.msra.mxu0 0.0
        %948 = vmatprep.subr.mxu0 0.0
        %949 = vmatpush1.msra.mxu0 0.0
        %950 = vmatprep.subr.mxu0 0.0
        %951 = vmatpush1.msra.mxu0 0.0
        %952 = vmatprep.subr.mxu0 0.0
        %953 = vmatpush1.msra.mxu0 0.0
        %954 = vmatprep.subr.mxu0 0.0
        %955 = vmatpush1.msra.mxu0 0.0
        %956 = vmatprep.subr.mxu0 0.0
        %957 = vmatpush1.msra.mxu0 0.0
        %958 = vmatprep.subr.mxu0 0.0
        %959 = vmatpush1.msra.mxu0 0.0
        %960 = vmatprep.subr.mxu0 0.0
        %961 = vmatpush1.msra.mxu0 0.0
        %962 = vmatprep.subr.mxu0 0.0
        %963 = vmatpush1.msra.mxu0 0.0
        %964 = vmatprep.subr.mxu0 0.0
        %965 = vmatpush1.msra.mxu0 0.0
        %966 = vmatprep.subr.mxu0 0.0
        %967 = vmatpush1.msra.mxu0 0.0
        %968 = vmatprep.subr.mxu0 0.0
        %969 = vmatpush1.msra.mxu0 0.0
        %970 = vmatprep.subr.mxu0 0.0
        %971 = vmatpush1.msra.mxu0 0.0
        %972 = vmatprep.subr.mxu0 0.0
        %973 = vmatpush1.msra.mxu0 0.0
        %974 = vmatprep.subr.mxu0 0.0
        %975 = vmatpush1.msra.mxu0 0.0
        %976 = vmatprep.subr.mxu0 0.0
        %977 = vmatpush1.msra.mxu0 0.0
        %978 = vmatprep.subr.mxu0 0.0
        %979 = vmatpush1.msra.mxu0 0.0
        %980 = vmatprep.mubr.f32.mxu0 0.0
        %v981 = vand.u32 %v241, 4294901760
        %v982 = vsub.f32 %v241, %v981
        %v983 = vand.u32 %v982, 4294901760
        %984 = vmatmul.mubr.f32.gmra.mrb[0].mxu0 %v983
        %v985 = vpop.f32.mrb[0].mxu0
        %v986 = vadd.f32 %v912, %v985
        %v987 = vpop.f32.mrb[0].mxu0
        %988 = vdwg.mxu0
        %989 = vmatprep.subr.mxu0 0.0
        %v990 = vand.u32 %v235, 4294901760
        %v991 = vsub.f32 %v235, %v990
        %v992 = vand.u32 %v991, 4294901760
        %993 = vmatpush1.msra.mxu0 %v992
        %994 = vmatprep.subr.mxu0 0.0
        %995 = vmatpush1.msra.mxu0 0.0
        %996 = vmatprep.subr.mxu0 0.0
        %997 = vmatpush1.msra.mxu0 0.0
        %998 = vmatprep.subr.mxu0 0.0
        %999 = vmatpush1.msra.mxu0 0.0
        %1000 = vmatprep.subr.mxu0 0.0
        %1001 = vmatpush1.msra.mxu0 0.0
        %1002 = vmatprep.subr.mxu0 0.0
        %1003 = vmatpush1.msra.mxu0 0.0
        %1004 = vmatprep.subr.mxu0 0.0
        %1005 = vmatpush1.msra.mxu0 0.0
        %1006 = vmatprep.subr.mxu0 0.0
        %1007 = vmatpush1.msra.mxu0 0.0
        %1008 = vmatprep.subr.mxu0 0.0
        %1009 = vmatpush1.msra.mxu0 0.0
        %1010 = vmatprep.subr.mxu0 0.0
        %1011 = vmatpush1.msra.mxu0 0.0
        %1012 = vmatprep.subr.mxu0 0.0
        %1013 = vmatpush1.msra.mxu0 0.0
        %1014 = vmatprep.subr.mxu0 0.0
        %1015 = vmatpush1.msra.mxu0 0.0
        %1016 = vmatprep.subr.mxu0 0.0
        %1017 = vmatpush1.msra.mxu0 0.0
        %1018 = vmatprep.subr.mxu0 0.0
        %1019 = vmatpush1.msra.mxu0 0.0
        %1020 = vmatprep.subr.mxu0 0.0
        %1021 = vmatpush1.msra.mxu0 0.0
        %1022 = vmatprep.subr.mxu0 0.0
        %1023 = vmatpush1.msra.mxu0 0.0
        %1024 = vmatprep.subr.mxu0 0.0
        %1025 = vmatpush1.msra.mxu0 0.0
        %1026 = vmatprep.subr.mxu0 0.0
        %1027 = vmatpush1.msra.mxu0 0.0
        %1028 = vmatprep.subr.mxu0 0.0
        %1029 = vmatpush1.msra.mxu0 0.0
        %1030 = vmatprep.subr.mxu0 0.0
        %1031 = vmatpush1.msra.mxu0 0.0
        %1032 = vmatprep.subr.mxu0 0.0
        %1033 = vmatpush1.msra.mxu0 0.0
        %1034 = vmatprep.subr.mxu0 0.0
        %1035 = vmatpush1.msra.mxu0 0.0
        %1036 = vmatprep.subr.mxu0 0.0
        %1037 = vmatpush1.msra.mxu0 0.0
        %1038 = vmatprep.subr.mxu0 0.0
        %1039 = vmatpush1.msra.mxu0 0.0
        %1040 = vmatprep.subr.mxu0 0.0
        %1041 = vmatpush1.msra.mxu0 0.0
        %1042 = vmatprep.subr.mxu0 0.0
        %1043 = vmatpush1.msra.mxu0 0.0
        %1044 = vmatprep.subr.mxu0 0.0
        %1045 = vmatpush1.msra.mxu0 0.0
        %1046 = vmatprep.subr.mxu0 0.0
        %1047 = vmatpush1.msra.mxu0 0.0
        %1048 = vmatprep.subr.mxu0 0.0
        %1049 = vmatpush1.msra.mxu0 0.0
        %1050 = vmatprep.subr.mxu0 0.0
        %1051 = vmatpush1.msra.mxu0 0.0
        %1052 = vmatprep.subr.mxu0 0.0
        %1053 = vmatpush1.msra.mxu0 0.0
        %1054 = vmatprep.subr.mxu0 0.0
        %1055 = vmatpush1.msra.mxu0 0.0
        %1056 = vmatprep.mubr.f32.mxu0 0.0
        %v1057 = vand.u32 %v241, 4294901760
        %1058 = vmatmul.mubr.f32.gmra.mrb[0].mxu0 %v1057
        %v1059 = vpop.f32.mrb[0].mxu0
        %v1060 = vadd.f32 %v986, %v1059
        %v1061 = vpop.f32.mrb[0].mxu0
        %1062 = vdwg.mxu0
        %1063 = vmatprep.subr.mxu0 0.0
        %v1064 = vand.u32 %v235, 4294901760
        %1065 = vmatpush1.msra.mxu0 %v1064
        %1066 = vmatprep.subr.mxu0 0.0
        %1067 = vmatpush1.msra.mxu0 0.0
        %1068 = vmatprep.subr.mxu0 0.0
        %1069 = vmatpush1.msra.mxu0 0.0
        %1070 = vmatprep.subr.mxu0 0.0
        %1071 = vmatpush1.msra.mxu0 0.0
        %1072 = vmatprep.subr.mxu0 0.0
        %1073 = vmatpush1.msra.mxu0 0.0
        %1074 = vmatprep.subr.mxu0 0.0
        %1075 = vmatpush1.msra.mxu0 0.0
        %1076 = vmatprep.subr.mxu0 0.0
        %1077 = vmatpush1.msra.mxu0 0.0
        %1078 = vmatprep.subr.mxu0 0.0
        %1079 = vmatpush1.msra.mxu0 0.0
        %1080 = vmatprep.subr.mxu0 0.0
        %1081 = vmatpush1.msra.mxu0 0.0
        %1082 = vmatprep.subr.mxu0 0.0
        %1083 = vmatpush1.msra.mxu0 0.0
        %1084 = vmatprep.subr.mxu0 0.0
        %1085 = vmatpush1.msra.mxu0 0.0
        %1086 = vmatprep.subr.mxu0 0.0
        %1087 = vmatpush1.msra.mxu0 0.0
        %1088 = vmatprep.subr.mxu0 0.0
        %1089 = vmatpush1.msra.mxu0 0.0
        %1090 = vmatprep.subr.mxu0 0.0
        %1091 = vmatpush1.msra.mxu0 0.0
        %1092 = vmatprep.subr.mxu0 0.0
        %1093 = vmatpush1.msra.mxu0 0.0
        %1094 = vmatprep.subr.mxu0 0.0
        %1095 = vmatpush1.msra.mxu0 0.0
        %1096 = vmatprep.subr.mxu0 0.0
        %1097 = vmatpush1.msra.mxu0 0.0
        %1098 = vmatprep.subr.mxu0 0.0
        %1099 = vmatpush1.msra.mxu0 0.0
        %1100 = vmatprep.subr.mxu0 0.0
        %1101 = vmatpush1.msra.mxu0 0.0
        %1102 = vmatprep.subr.mxu0 0.0
        %1103 = vmatpush1.msra.mxu0 0.0
        %1104 = vmatprep.subr.mxu0 0.0
        %1105 = vmatpush1.msra.mxu0 0.0
        %1106 = vmatprep.subr.mxu0 0.0
        %1107 = vmatpush1.msra.mxu0 0.0
        %1108 = vmatprep.subr.mxu0 0.0
        %1109 = vmatpush1.msra.mxu0 0.0
        %1110 = vmatprep.subr.mxu0 0.0
        %1111 = vmatpush1.msra.mxu0 0.0
        %1112 = vmatprep.subr.mxu0 0.0
        %1113 = vmatpush1.msra.mxu0 0.0
        %1114 = vmatprep.subr.mxu0 0.0
        %1115 = vmatpush1.msra.mxu0 0.0
        %1116 = vmatprep.subr.mxu0 0.0
        %1117 = vmatpush1.msra.mxu0 0.0
        %1118 = vmatprep.subr.mxu0 0.0
        %1119 = vmatpush1.msra.mxu0 0.0
        %1120 = vmatprep.subr.mxu0 0.0
        %1121 = vmatpush1.msra.mxu0 0.0
        %1122 = vmatprep.subr.mxu0 0.0
        %1123 = vmatpush1.msra.mxu0 0.0
        %1124 = vmatprep.subr.mxu0 0.0
        %1125 = vmatpush1.msra.mxu0 0.0
        %1126 = vmatprep.subr.mxu0 0.0
        %1127 = vmatpush1.msra.mxu0 0.0
        %1128 = vmatprep.mubr.f32.mxu0 0.0
        %v1129 = vand.u32 %v241, 4294901760
        %1130 = vmatmul.mubr.f32.gmra.mrb[0].mxu0 %v1129
        %v1131 = vpop.f32.mrb[0].mxu0
        %v1132 = vadd.f32 %v1060, %v1131
        %v1133 = vpop.f32.mrb[0].mxu0
        %1134 = vdwg.mxu0
        %1135 = vmatprep.subr.mxu0 0.0
        %v1136 = vand.u32 %v236, 4294901760
        %1137 = vmatpush1.msra.mxu0 %v1136
        %1138 = vmatprep.subr.mxu0 0.0
        %1139 = vmatpush1.msra.mxu0 0.0
        %1140 = vmatprep.subr.mxu0 0.0
        %1141 = vmatpush1.msra.mxu0 0.0
        %1142 = vmatprep.subr.mxu0 0.0
        %1143 = vmatpush1.msra.mxu0 0.0
        %1144 = vmatprep.subr.mxu0 0.0
        %1145 = vmatpush1.msra.mxu0 0.0
        %1146 = vmatprep.subr.mxu0 0.0
        %1147 = vmatpush1.msra.mxu0 0.0
        %1148 = vmatprep.subr.mxu0 0.0
        %1149 = vmatpush1.msra.mxu0 0.0
        %1150 = vmatprep.subr.mxu0 0.0
        %1151 = vmatpush1.msra.mxu0 0.0
        %1152 = vmatprep.subr.mxu0 0.0
        %1153 = vmatpush1.msra.mxu0 0.0
        %1154 = vmatprep.subr.mxu0 0.0
        %1155 = vmatpush1.msra.mxu0 0.0
        %1156 = vmatprep.subr.mxu0 0.0
        %1157 = vmatpush1.msra.mxu0 0.0
        %1158 = vmatprep.subr.mxu0 0.0
        %1159 = vmatpush1.msra.mxu0 0.0
        %1160 = vmatprep.subr.mxu0 0.0
        %1161 = vmatpush1.msra.mxu0 0.0
        %1162 = vmatprep.subr.mxu0 0.0
        %1163 = vmatpush1.msra.mxu0 0.0
        %1164 = vmatprep.subr.mxu0 0.0
        %1165 = vmatpush1.msra.mxu0 0.0
        %1166 = vmatprep.subr.mxu0 0.0
        %1167 = vmatpush1.msra.mxu0 0.0
        %1168 = vmatprep.subr.mxu0 0.0
        %1169 = vmatpush1.msra.mxu0 0.0
        %1170 = vmatprep.subr.mxu0 0.0
        %1171 = vmatpush1.msra.mxu0 0.0
        %1172 = vmatprep.subr.mxu0 0.0
        %1173 = vmatpush1.msra.mxu0 0.0
        %1174 = vmatprep.subr.mxu0 0.0
        %1175 = vmatpush1.msra.mxu0 0.0
        %1176 = vmatprep.subr.mxu0 0.0
        %1177 = vmatpush1.msra.mxu0 0.0
        %1178 = vmatprep.subr.mxu0 0.0
        %1179 = vmatpush1.msra.mxu0 0.0
        %1180 = vmatprep.subr.mxu0 0.0
        %1181 = vmatpush1.msra.mxu0 0.0
        %1182 = vmatprep.subr.mxu0 0.0
        %1183 = vmatpush1.msra.mxu0 0.0
        %1184 = vmatprep.subr.mxu0 0.0
        %1185 = vmatpush1.msra.mxu0 0.0
        %1186 = vmatprep.subr.mxu0 0.0
        %1187 = vmatpush1.msra.mxu0 0.0
        %1188 = vmatprep.subr.mxu0 0.0
        %1189 = vmatpush1.msra.mxu0 0.0
        %1190 = vmatprep.subr.mxu0 0.0
        %1191 = vmatpush1.msra.mxu0 0.0
        %1192 = vmatprep.subr.mxu0 0.0
        %1193 = vmatpush1.msra.mxu0 0.0
        %1194 = vmatprep.subr.mxu0 0.0
        %1195 = vmatpush1.msra.mxu0 0.0
        %1196 = vmatprep.subr.mxu0 0.0
        %1197 = vmatpush1.msra.mxu0 0.0
        %1198 = vmatprep.subr.mxu0 0.0
        %1199 = vmatpush1.msra.mxu0 0.0
        %1200 = vmatprep.mubr.f32.mxu0 0.0
        %v1201 = vand.u32 %v241, 4294901760
        %v1202 = vsub.f32 %v241, %v1201
        %v1203 = vand.u32 %v1202, 4294901760
        %v1204 = vsub.f32 %v1202, %v1203
        %v1205 = vand.u32 %v1204, 4294901760
        %1206 = vmatmul.mubr.f32.gmra.mrb[0].mxu0 %v1205
        %v1207 = vpop.f32.mrb[0].mxu0
        %v1208 = vadd.f32 0.0, %v1207
        %v1209 = vpop.f32.mrb[0].mxu0
        %1210 = vdwg.mxu0
        %1211 = vmatprep.subr.mxu0 0.0
        %v1212 = vand.u32 %v236, 4294901760
        %v1213 = vsub.f32 %v236, %v1212
        %v1214 = vand.u32 %v1213, 4294901760
        %v1215 = vsub.f32 %v1213, %v1214
        %v1216 = vand.u32 %v1215, 4294901760
        %1217 = vmatpush1.msra.mxu0 %v1216
        %1218 = vmatprep.subr.mxu0 0.0
        %1219 = vmatpush1.msra.mxu0 0.0
        %1220 = vmatprep.subr.mxu0 0.0
        %1221 = vmatpush1.msra.mxu0 0.0
        %1222 = vmatprep.subr.mxu0 0.0
        %1223 = vmatpush1.msra.mxu0 0.0
        %1224 = vmatprep.subr.mxu0 0.0
        %1225 = vmatpush1.msra.mxu0 0.0
        %1226 = vmatprep.subr.mxu0 0.0
        %1227 = vmatpush1.msra.mxu0 0.0
        %1228 = vmatprep.subr.mxu0 0.0
        %1229 = vmatpush1.msra.mxu0 0.0
        %1230 = vmatprep.subr.mxu0 0.0
        %1231 = vmatpush1.msra.mxu0 0.0
        %1232 = vmatprep.subr.mxu0 0.0
        %1233 = vmatpush1.msra.mxu0 0.0
        %1234 = vmatprep.subr.mxu0 0.0
        %1235 = vmatpush1.msra.mxu0 0.0
        %1236 = vmatprep.subr.mxu0 0.0
        %1237 = vmatpush1.msra.mxu0 0.0
        %1238 = vmatprep.subr.mxu0 0.0
        %1239 = vmatpush1.msra.mxu0 0.0
        %1240 = vmatprep.subr.mxu0 0.0
        %1241 = vmatpush1.msra.mxu0 0.0
        %1242 = vmatprep.subr.mxu0 0.0
        %1243 = vmatpush1.msra.mxu0 0.0
        %1244 = vmatprep.subr.mxu0 0.0
        %1245 = vmatpush1.msra.mxu0 0.0
        %1246 = vmatprep.subr.mxu0 0.0
        %1247 = vmatpush1.msra.mxu0 0.0
        %1248 = vmatprep.subr.mxu0 0.0
        %1249 = vmatpush1.msra.mxu0 0.0
        %1250 = vmatprep.subr.mxu0 0.0
        %1251 = vmatpush1.msra.mxu0 0.0
        %1252 = vmatprep.subr.mxu0 0.0
        %1253 = vmatpush1.msra.mxu0 0.0
        %1254 = vmatprep.subr.mxu0 0.0
        %1255 = vmatpush1.msra.mxu0 0.0
        %1256 = vmatprep.subr.mxu0 0.0
        %1257 = vmatpush1.msra.mxu0 0.0
        %1258 = vmatprep.subr.mxu0 0.0
        %1259 = vmatpush1.msra.mxu0 0.0
        %1260 = vmatprep.subr.mxu0 0.0
        %1261 = vmatpush1.msra.mxu0 0.0
        %1262 = vmatprep.subr.mxu0 0.0
        %1263 = vmatpush1.msra.mxu0 0.0
        %1264 = vmatprep.subr.mxu0 0.0
        %1265 = vmatpush1.msra.mxu0 0.0
        %1266 = vmatprep.subr.mxu0 0.0
        %1267 = vmatpush1.msra.mxu0 0.0
        %1268 = vmatprep.subr.mxu0 0.0
        %1269 = vmatpush1.msra.mxu0 0.0
        %1270 = vmatprep.subr.mxu0 0.0
        %1271 = vmatpush1.msra.mxu0 0.0
        %1272 = vmatprep.subr.mxu0 0.0
        %1273 = vmatpush1.msra.mxu0 0.0
        %1274 = vmatprep.subr.mxu0 0.0
        %1275 = vmatpush1.msra.mxu0 0.0
        %1276 = vmatprep.subr.mxu0 0.0
        %1277 = vmatpush1.msra.mxu0 0.0
        %1278 = vmatprep.subr.mxu0 0.0
        %1279 = vmatpush1.msra.mxu0 0.0
        %1280 = vmatprep.mubr.f32.mxu0 0.0
        %v1281 = vand.u32 %v241, 4294901760
        %1282 = vmatmul.mubr.f32.gmra.mrb[0].mxu0 %v1281
        %v1283 = vpop.f32.mrb[0].mxu0
        %v1284 = vadd.f32 %v1208, %v1283
        %v1285 = vpop.f32.mrb[0].mxu0
        %1286 = vdwg.mxu0
        %1287 = vmatprep.subr.mxu0 0.0
        %v1288 = vand.u32 %v236, 4294901760
        %v1289 = vsub.f32 %v236, %v1288
        %1290 = vmatpush1.msra.mxu0 %v1289
        %1291 = vmatprep.subr.mxu0 0.0
        %1292 = vmatpush1.msra.mxu0 0.0
        %1293 = vmatprep.subr.mxu0 0.0
        %1294 = vmatpush1.msra.mxu0 0.0
        %1295 = vmatprep.subr.mxu0 0.0
        %1296 = vmatpush1.msra.mxu0 0.0
        %1297 = vmatprep.subr.mxu0 0.0
        %1298 = vmatpush1.msra.mxu0 0.0
        %1299 = vmatprep.subr.mxu0 0.0
        %1300 = vmatpush1.msra.mxu0 0.0
        %1301 = vmatprep.subr.mxu0 0.0
        %1302 = vmatpush1.msra.mxu0 0.0
        %1303 = vmatprep.subr.mxu0 0.0
        %1304 = vmatpush1.msra.mxu0 0.0
        %1305 = vmatprep.subr.mxu0 0.0
        %1306 = vmatpush1.msra.mxu0 0.0
        %1307 = vmatprep.subr.mxu0 0.0
        %1308 = vmatpush1.msra.mxu0 0.0
        %1309 = vmatprep.subr.mxu0 0.0
        %1310 = vmatpush1.msra.mxu0 0.0
        %1311 = vmatprep.subr.mxu0 0.0
        %1312 = vmatpush1.msra.mxu0 0.0
        %1313 = vmatprep.subr.mxu0 0.0
        %1314 = vmatpush1.msra.mxu0 0.0
        %1315 = vmatprep.subr.mxu0 0.0
        %1316 = vmatpush1.msra.mxu0 0.0
        %1317 = vmatprep.subr.mxu0 0.0
        %1318 = vmatpush1.msra.mxu0 0.0
        %1319 = vmatprep.subr.mxu0 0.0
        %1320 = vmatpush1.msra.mxu0 0.0
        %1321 = vmatprep.subr.mxu0 0.0
        %1322 = vmatpush1.msra.mxu0 0.0
        %1323 = vmatprep.subr.mxu0 0.0
        %1324 = vmatpush1.msra.mxu0 0.0
        %1325 = vmatprep.subr.mxu0 0.0
        %1326 = vmatpush1.msra.mxu0 0.0
        %1327 = vmatprep.subr.mxu0 0.0
        %1328 = vmatpush1.msra.mxu0 0.0
        %1329 = vmatprep.subr.mxu0 0.0
        %1330 = vmatpush1.msra.mxu0 0.0
        %1331 = vmatprep.subr.mxu0 0.0
        %1332 = vmatpush1.msra.mxu0 0.0
        %1333 = vmatprep.subr.mxu0 0.0
        %1334 = vmatpush1.msra.mxu0 0.0
        %1335 = vmatprep.subr.mxu0 0.0
        %1336 = vmatpush1.msra.mxu0 0.0
        %1337 = vmatprep.subr.mxu0 0.0
        %1338 = vmatpush1.msra.mxu0 0.0
        %1339 = vmatprep.subr.mxu0 0.0
        %1340 = vmatpush1.msra.mxu0 0.0
        %1341 = vmatprep.subr.mxu0 0.0
        %1342 = vmatpush1.msra.mxu0 0.0
        %1343 = vmatprep.subr.mxu0 0.0
        %1344 = vmatpush1.msra.mxu0 0.0
        %1345 = vmatprep.subr.mxu0 0.0
        %1346 = vmatpush1.msra.mxu0 0.0
        %1347 = vmatprep.subr.mxu0 0.0
        %1348 = vmatpush1.msra.mxu0 0.0
        %1349 = vmatprep.subr.mxu0 0.0
        %1350 = vmatpush1.msra.mxu0 0.0
        %1351 = vmatprep.subr.mxu0 0.0
        %1352 = vmatpush1.msra.mxu0 0.0
        %1353 = vmatprep.mubr.f32.mxu0 0.0
        %v1354 = vand.u32 %v241, 4294901760
        %v1355 = vsub.f32 %v241, %v1354
        %1356 = vmatmul.mubr.f32.gmra.mrb[0].mxu0 %v1355
        %v1357 = vpop.f32.mrb[0].mxu0
        %v1358 = vadd.f32 %v1284, %v1357
        %v1359 = vpop.f32.mrb[0].mxu0
        %1360 = vdwg.mxu0
        %1361 = vmatprep.subr.mxu0 0.0
        %v1362 = vand.u32 %v236, 4294901760
        %1363 = vmatpush1.msra.mxu0 %v1362
        %1364 = vmatprep.subr.mxu0 0.0
        %1365 = vmatpush1.msra.mxu0 0.0
        %1366 = vmatprep.subr.mxu0 0.0
        %1367 = vmatpush1.msra.mxu0 0.0
        %1368 = vmatprep.subr.mxu0 0.0
        %1369 = vmatpush1.msra.mxu0 0.0
        %1370 = vmatprep.subr.mxu0 0.0
        %1371 = vmatpush1.msra.mxu0 0.0
        %1372 = vmatprep.subr.mxu0 0.0
        %1373 = vmatpush1.msra.mxu0 0.0
        %1374 = vmatprep.subr.mxu0 0.0
        %1375 = vmatpush1.msra.mxu0 0.0
        %1376 = vmatprep.subr.mxu0 0.0
        %1377 = vmatpush1.msra.mxu0 0.0
        %1378 = vmatprep.subr.mxu0 0.0
        %1379 = vmatpush1.msra.mxu0 0.0
        %1380 = vmatprep.subr.mxu0 0.0
        %1381 = vmatpush1.msra.mxu0 0.0
        %1382 = vmatprep.subr.mxu0 0.0
        %1383 = vmatpush1.msra.mxu0 0.0
        %1384 = vmatprep.subr.mxu0 0.0
        %1385 = vmatpush1.msra.mxu0 0.0
        %1386 = vmatprep.subr.mxu0 0.0
        %1387 = vmatpush1.msra.mxu0 0.0
        %1388 = vmatprep.subr.mxu0 0.0
        %1389 = vmatpush1.msra.mxu0 0.0
        %1390 = vmatprep.subr.mxu0 0.0
        %1391 = vmatpush1.msra.mxu0 0.0
        %1392 = vmatprep.subr.mxu0 0.0
        %1393 = vmatpush1.msra.mxu0 0.0
        %1394 = vmatprep.subr.mxu0 0.0
        %1395 = vmatpush1.msra.mxu0 0.0
        %1396 = vmatprep.subr.mxu0 0.0
        %1397 = vmatpush1.msra.mxu0 0.0
        %1398 = vmatprep.subr.mxu0 0.0
        %1399 = vmatpush1.msra.mxu0 0.0
        %1400 = vmatprep.subr.mxu0 0.0
        %1401 = vmatpush1.msra.mxu0 0.0
        %1402 = vmatprep.subr.mxu0 0.0
        %1403 = vmatpush1.msra.mxu0 0.0
        %1404 = vmatprep.subr.mxu0 0.0
        %1405 = vmatpush1.msra.mxu0 0.0
        %1406 = vmatprep.subr.mxu0 0.0
        %1407 = vmatpush1.msra.mxu0 0.0
        %1408 = vmatprep.subr.mxu0 0.0
        %1409 = vmatpush1.msra.mxu0 0.0
        %1410 = vmatprep.subr.mxu0 0.0
        %1411 = vmatpush1.msra.mxu0 0.0
        %1412 = vmatprep.subr.mxu0 0.0
        %1413 = vmatpush1.msra.mxu0 0.0
        %1414 = vmatprep.subr.mxu0 0.0
        %1415 = vmatpush1.msra.mxu0 0.0
        %1416 = vmatprep.subr.mxu0 0.0
        %1417 = vmatpush1.msra.mxu0 0.0
        %1418 = vmatprep.subr.mxu0 0.0
        %1419 = vmatpush1.msra.mxu0 0.0
        %1420 = vmatprep.subr.mxu0 0.0
        %1421 = vmatpush1.msra.mxu0 0.0
        %1422 = vmatprep.subr.mxu0 0.0
        %1423 = vmatpush1.msra.mxu0 0.0
        %1424 = vmatprep.subr.mxu0 0.0
        %1425 = vmatpush1.msra.mxu0 0.0
        %1426 = vmatprep.mubr.f32.mxu0 0.0
        %v1427 = vand.u32 %v241, 4294901760
        %v1428 = vsub.f32 %v241, %v1427
        %v1429 = vand.u32 %v1428, 4294901760
        %1430 = vmatmul.mubr.f32.gmra.mrb[0].mxu0 %v1429
        %v1431 = vpop.f32.mrb[0].mxu0
        %v1432 = vadd.f32 %v1358, %v1431
        %v1433 = vpop.f32.mrb[0].mxu0
        %1434 = vdwg.mxu0
        %1435 = vmatprep.subr.mxu0 0.0
        %v1436 = vand.u32 %v236, 4294901760
        %v1437 = vsub.f32 %v236, %v1436
        %v1438 = vand.u32 %v1437, 4294901760
        %1439 = vmatpush1.msra.mxu0 %v1438
        %1440 = vmatprep.subr.mxu0 0.0
        %1441 = vmatpush1.msra.mxu0 0.0
        %1442 = vmatprep.subr.mxu0 0.0
        %1443 = vmatpush1.msra.mxu0 0.0
        %1444 = vmatprep.subr.mxu0 0.0
        %1445 = vmatpush1.msra.mxu0 0.0
        %1446 = vmatprep.subr.mxu0 0.0
        %1447 = vmatpush1.msra.mxu0 0.0
        %1448 = vmatprep.subr.mxu0 0.0
        %1449 = vmatpush1.msra.mxu0 0.0
        %1450 = vmatprep.subr.mxu0 0.0
        %1451 = vmatpush1.msra.mxu0 0.0
        %1452 = vmatprep.subr.mxu0 0.0
        %1453 = vmatpush1.msra.mxu0 0.0
        %1454 = vmatprep.subr.mxu0 0.0
        %1455 = vmatpush1.msra.mxu0 0.0
        %1456 = vmatprep.subr.mxu0 0.0
        %1457 = vmatpush1.msra.mxu0 0.0
        %1458 = vmatprep.subr.mxu0 0.0
        %1459 = vmatpush1.msra.mxu0 0.0
        %1460 = vmatprep.subr.mxu0 0.0
        %1461 = vmatpush1.msra.mxu0 0.0
        %1462 = vmatprep.subr.mxu0 0.0
        %1463 = vmatpush1.msra.mxu0 0.0
        %1464 = vmatprep.subr.mxu0 0.0
        %1465 = vmatpush1.msra.mxu0 0.0
        %1466 = vmatprep.subr.mxu0 0.0
        %1467 = vmatpush1.msra.mxu0 0.0
        %1468 = vmatprep.subr.mxu0 0.0
        %1469 = vmatpush1.msra.mxu0 0.0
        %1470 = vmatprep.subr.mxu0 0.0
        %1471 = vmatpush1.msra.mxu0 0.0
        %1472 = vmatprep.subr.mxu0 0.0
        %1473 = vmatpush1.msra.mxu0 0.0
        %1474 = vmatprep.subr.mxu0 0.0
        %1475 = vmatpush1.msra.mxu0 0.0
        %1476 = vmatprep.subr.mxu0 0.0
        %1477 = vmatpush1.msra.mxu0 0.0
        %1478 = vmatprep.subr.mxu0 0.0
        %1479 = vmatpush1.msra.mxu0 0.0
        %1480 = vmatprep.subr.mxu0 0.0
        %1481 = vmatpush1.msra.mxu0 0.0
        %1482 = vmatprep.subr.mxu0 0.0
        %1483 = vmatpush1.msra.mxu0 0.0
        %1484 = vmatprep.subr.mxu0 0.0
        %1485 = vmatpush1.msra.mxu0 0.0
        %1486 = vmatprep.subr.mxu0 0.0
        %1487 = vmatpush1.msra.mxu0 0.0
        %1488 = vmatprep.subr.mxu0 0.0
        %1489 = vmatpush1.msra.mxu0 0.0
        %1490 = vmatprep.subr.mxu0 0.0
        %1491 = vmatpush1.msra.mxu0 0.0
        %1492 = vmatprep.subr.mxu0 0.0
        %1493 = vmatpush1.msra.mxu0 0.0
        %1494 = vmatprep.subr.mxu0 0.0
        %1495 = vmatpush1.msra.mxu0 0.0
        %1496 = vmatprep.subr.mxu0 0.0
        %1497 = vmatpush1.msra.mxu0 0.0
        %1498 = vmatprep.subr.mxu0 0.0
        %1499 = vmatpush1.msra.mxu0 0.0
        %1500 = vmatprep.subr.mxu0 0.0
        %1501 = vmatpush1.msra.mxu0 0.0
        %1502 = vmatprep.mubr.f32.mxu0 0.0
        %v1503 = vand.u32 %v241, 4294901760
        %1504 = vmatmul.mubr.f32.gmra.mrb[0].mxu0 %v1503
        %v1505 = vpop.f32.mrb[0].mxu0
        %v1506 = vadd.f32 %v1432, %v1505
        %v1507 = vpop.f32.mrb[0].mxu0
        %1508 = vdwg.mxu0
        %1509 = vmatprep.subr.mxu0 0.0
        %v1510 = vand.u32 %v236, 4294901760
        %1511 = vmatpush1.msra.mxu0 %v1510
        %1512 = vmatprep.subr.mxu0 0.0
        %1513 = vmatpush1.msra.mxu0 0.0
        %1514 = vmatprep.subr.mxu0 0.0
        %1515 = vmatpush1.msra.mxu0 0.0
        %1516 = vmatprep.subr.mxu0 0.0
        %1517 = vmatpush1.msra.mxu0 0.0
        %1518 = vmatprep.subr.mxu0 0.0
        %1519 = vmatpush1.msra.mxu0 0.0
        %1520 = vmatprep.subr.mxu0 0.0
        %1521 = vmatpush1.msra.mxu0 0.0
        %1522 = vmatprep.subr.mxu0 0.0
        %1523 = vmatpush1.msra.mxu0 0.0
        %1524 = vmatprep.subr.mxu0 0.0
        %1525 = vmatpush1.msra.mxu0 0.0
        %1526 = vmatprep.subr.mxu0 0.0
        %1527 = vmatpush1.msra.mxu0 0.0
        %1528 = vmatprep.subr.mxu0 0.0
        %1529 = vmatpush1.msra.mxu0 0.0
        %1530 = vmatprep.subr.mxu0 0.0
        %1531 = vmatpush1.msra.mxu0 0.0
        %1532 = vmatprep.subr.mxu0 0.0
        %1533 = vmatpush1.msra.mxu0 0.0
        %1534 = vmatprep.subr.mxu0 0.0
        %1535 = vmatpush1.msra.mxu0 0.0
        %1536 = vmatprep.subr.mxu0 0.0
        %1537 = vmatpush1.msra.mxu0 0.0
        %1538 = vmatprep.subr.mxu0 0.0
        %1539 = vmatpush1.msra.mxu0 0.0
        %1540 = vmatprep.subr.mxu0 0.0
        %1541 = vmatpush1.msra.mxu0 0.0
        %1542 = vmatprep.subr.mxu0 0.0
        %1543 = vmatpush1.msra.mxu0 0.0
        %1544 = vmatprep.subr.mxu0 0.0
        %1545 = vmatpush1.msra.mxu0 0.0
        %1546 = vmatprep.subr.mxu0 0.0
        %1547 = vmatpush1.msra.mxu0 0.0
        %1548 = vmatprep.subr.mxu0 0.0
        %1549 = vmatpush1.msra.mxu0 0.0
        %1550 = vmatprep.subr.mxu0 0.0
        %1551 = vmatpush1.msra.mxu0 0.0
        %1552 = vmatprep.subr.mxu0 0.0
        %1553 = vmatpush1.msra.mxu0 0.0
        %1554 = vmatprep.subr.mxu0 0.0
        %1555 = vmatpush1.msra.mxu0 0.0
        %1556 = vmatprep.subr.mxu0 0.0
        %1557 = vmatpush1.msra.mxu0 0.0
        %1558 = vmatprep.subr.mxu0 0.0
        %1559 = vmatpush1.msra.mxu0 0.0
        %1560 = vmatprep.subr.mxu0 0.0
        %1561 = vmatpush1.msra.mxu0 0.0
        %1562 = vmatprep.subr.mxu0 0.0
        %1563 = vmatpush1.msra.mxu0 0.0
        %1564 = vmatprep.subr.mxu0 0.0
        %1565 = vmatpush1.msra.mxu0 0.0
        %1566 = vmatprep.subr.mxu0 0.0
        %1567 = vmatpush1.msra.mxu0 0.0
        %1568 = vmatprep.subr.mxu0 0.0
        %1569 = vmatpush1.msra.mxu0 0.0
        %1570 = vmatprep.subr.mxu0 0.0
        %1571 = vmatpush1.msra.mxu0 0.0
        %1572 = vmatprep.subr.mxu0 0.0
        %1573 = vmatpush1.msra.mxu0 0.0
        %1574 = vmatprep.mubr.f32.mxu0 0.0
        %v1575 = vand.u32 %v241, 4294901760
        %1576 = vmatmul.mubr.f32.gmra.mrb[0].mxu0 %v1575
        %v1577 = vpop.f32.mrb[0].mxu0
        %v1578 = vadd.f32 %v1506, %v1577
        %v1579 = vpop.f32.mrb[0].mxu0
        %1580 = vdwg.mxu0
        %1581 = vmatprep.subr.mxu0 0.0
        %v1582 = vand.u32 %v237, 4294901760
        %1583 = vmatpush1.msra.mxu0 %v1582
        %1584 = vmatprep.subr.mxu0 0.0
        %1585 = vmatpush1.msra.mxu0 0.0
        %1586 = vmatprep.subr.mxu0 0.0
        %1587 = vmatpush1.msra.mxu0 0.0
        %1588 = vmatprep.subr.mxu0 0.0
        %1589 = vmatpush1.msra.mxu0 0.0
        %1590 = vmatprep.subr.mxu0 0.0
        %1591 = vmatpush1.msra.mxu0 0.0
        %1592 = vmatprep.subr.mxu0 0.0
        %1593 = vmatpush1.msra.mxu0 0.0
        %1594 = vmatprep.subr.mxu0 0.0
        %1595 = vmatpush1.msra.mxu0 0.0
        %1596 = vmatprep.subr.mxu0 0.0
        %1597 = vmatpush1.msra.mxu0 0.0
        %1598 = vmatprep.subr.mxu0 0.0
        %1599 = vmatpush1.msra.mxu0 0.0
        %1600 = vmatprep.subr.mxu0 0.0
        %1601 = vmatpush1.msra.mxu0 0.0
        %1602 = vmatprep.subr.mxu0 0.0
        %1603 = vmatpush1.msra.mxu0 0.0
        %1604 = vmatprep.subr.mxu0 0.0
        %1605 = vmatpush1.msra.mxu0 0.0
        %1606 = vmatprep.subr.mxu0 0.0
        %1607 = vmatpush1.msra.mxu0 0.0
        %1608 = vmatprep.subr.mxu0 0.0
        %1609 = vmatpush1.msra.mxu0 0.0
        %1610 = vmatprep.subr.mxu0 0.0
        %1611 = vmatpush1.msra.mxu0 0.0
        %1612 = vmatprep.subr.mxu0 0.0
        %1613 = vmatpush1.msra.mxu0 0.0
        %1614 = vmatprep.subr.mxu0 0.0
        %1615 = vmatpush1.msra.mxu0 0.0
        %1616 = vmatprep.subr.mxu0 0.0
        %1617 = vmatpush1.msra.mxu0 0.0
        %1618 = vmatprep.subr.mxu0 0.0
        %1619 = vmatpush1.msra.mxu0 0.0
        %1620 = vmatprep.subr.mxu0 0.0
        %1621 = vmatpush1.msra.mxu0 0.0
        %1622 = vmatprep.subr.mxu0 0.0
        %1623 = vmatpush1.msra.mxu0 0.0
        %1624 = vmatprep.subr.mxu0 0.0
        %1625 = vmatpush1.msra.mxu0 0.0
        %1626 = vmatprep.subr.mxu0 0.0
        %1627 = vmatpush1.msra.mxu0 0.0
        %1628 = vmatprep.subr.mxu0 0.0
        %1629 = vmatpush1.msra.mxu0 0.0
        %1630 = vmatprep.subr.mxu0 0.0
        %1631 = vmatpush1.msra.mxu0 0.0
        %1632 = vmatprep.subr.mxu0 0.0
        %1633 = vmatpush1.msra.mxu0 0.0
        %1634 = vmatprep.subr.mxu0 0.0
        %1635 = vmatpush1.msra.mxu0 0.0
        %1636 = vmatprep.subr.mxu0 0.0
        %1637 = vmatpush1.msra.mxu0 0.0
        %1638 = vmatprep.subr.mxu0 0.0
        %1639 = vmatpush1.msra.mxu0 0.0
        %1640 = vmatprep.subr.mxu0 0.0
        %1641 = vmatpush1.msra.mxu0 0.0
        %1642 = vmatprep.subr.mxu0 0.0
        %1643 = vmatpush1.msra.mxu0 0.0
        %1644 = vmatprep.subr.mxu0 0.0
        %1645 = vmatpush1.msra.mxu0 0.0
        %1646 = vmatprep.mubr.f32.mxu0 0.0
        %v1647 = vand.u32 %v241, 4294901760
        %v1648 = vsub.f32 %v241, %v1647
        %v1649 = vand.u32 %v1648, 4294901760
        %v1650 = vsub.f32 %v1648, %v1649
        %v1651 = vand.u32 %v1650, 4294901760
        %1652 = vmatmul.mubr.f32.gmra.mrb[0].mxu0 %v1651
        %v1653 = vpop.f32.mrb[0].mxu0
        %v1654 = vadd.f32 0.0, %v1653
        %v1655 = vpop.f32.mrb[0].mxu0
        %1656 = vdwg.mxu0
        %1657 = vmatprep.subr.mxu0 0.0
        %v1658 = vand.u32 %v237, 4294901760
        %v1659 = vsub.f32 %v237, %v1658
        %v1660 = vand.u32 %v1659, 4294901760
        %v1661 = vsub.f32 %v1659, %v1660
        %v1662 = vand.u32 %v1661, 4294901760
        %1663 = vmatpush1.msra.mxu0 %v1662
        %1664 = vmatprep.subr.mxu0 0.0
        %1665 = vmatpush1.msra.mxu0 0.0
        %1666 = vmatprep.subr.mxu0 0.0
        %1667 = vmatpush1.msra.mxu0 0.0
        %1668 = vmatprep.subr.mxu0 0.0
        %1669 = vmatpush1.msra.mxu0 0.0
        %1670 = vmatprep.subr.mxu0 0.0
        %1671 = vmatpush1.msra.mxu0 0.0
        %1672 = vmatprep.subr.mxu0 0.0
        %1673 = vmatpush1.msra.mxu0 0.0
        %1674 = vmatprep.subr.mxu0 0.0
        %1675 = vmatpush1.msra.mxu0 0.0
        %1676 = vmatprep.subr.mxu0 0.0
        %1677 = vmatpush1.msra.mxu0 0.0
        %1678 = vmatprep.subr.mxu0 0.0
        %1679 = vmatpush1.msra.mxu0 0.0
        %1680 = vmatprep.subr.mxu0 0.0
        %1681 = vmatpush1.msra.mxu0 0.0
        %1682 = vmatprep.subr.mxu0 0.0
        %1683 = vmatpush1.msra.mxu0 0.0
        %1684 = vmatprep.subr.mxu0 0.0
        %1685 = vmatpush1.msra.mxu0 0.0
        %1686 = vmatprep.subr.mxu0 0.0
        %1687 = vmatpush1.msra.mxu0 0.0
        %1688 = vmatprep.subr.mxu0 0.0
        %1689 = vmatpush1.msra.mxu0 0.0
        %1690 = vmatprep.subr.mxu0 0.0
        %1691 = vmatpush1.msra.mxu0 0.0
        %1692 = vmatprep.subr.mxu0 0.0
        %1693 = vmatpush1.msra.mxu0 0.0
        %1694 = vmatprep.subr.mxu0 0.0
        %1695 = vmatpush1.msra.mxu0 0.0
        %1696 = vmatprep.subr.mxu0 0.0
        %1697 = vmatpush1.msra.mxu0 0.0
        %1698 = vmatprep.subr.mxu0 0.0
        %1699 = vmatpush1.msra.mxu0 0.0
        %1700 = vmatprep.subr.mxu0 0.0
        %1701 = vmatpush1.msra.mxu0 0.0
        %1702 = vmatprep.subr.mxu0 0.0
        %1703 = vmatpush1.msra.mxu0 0.0
        %1704 = vmatprep.subr.mxu0 0.0
        %1705 = vmatpush1.msra.mxu0 0.0
        %1706 = vmatprep.subr.mxu0 0.0
        %1707 = vmatpush1.msra.mxu0 0.0
        %1708 = vmatprep.subr.mxu0 0.0
        %1709 = vmatpush1.msra.mxu0 0.0
        %1710 = vmatprep.subr.mxu0 0.0
        %1711 = vmatpush1.msra.mxu0 0.0
        %1712 = vmatprep.subr.mxu0 0.0
        %1713 = vmatpush1.msra.mxu0 0.0
        %1714 = vmatprep.subr.mxu0 0.0
        %1715 = vmatpush1.msra.mxu0 0.0
        %1716 = vmatprep.subr.mxu0 0.0
        %1717 = vmatpush1.msra.mxu0 0.0
        %1718 = vmatprep.subr.mxu0 0.0
        %1719 = vmatpush1.msra.mxu0 0.0
        %1720 = vmatprep.subr.mxu0 0.0
        %1721 = vmatpush1.msra.mxu0 0.0
        %1722 = vmatprep.subr.mxu0 0.0
        %1723 = vmatpush1.msra.mxu0 0.0
        %1724 = vmatprep.subr.mxu0 0.0
        %1725 = vmatpush1.msra.mxu0 0.0
        %1726 = vmatprep.mubr.f32.mxu0 0.0
        %v1727 = vand.u32 %v241, 4294901760
        %1728 = vmatmul.mubr.f32.gmra.mrb[0].mxu0 %v1727
        %v1729 = vpop.f32.mrb[0].mxu0
        %v1730 = vadd.f32 %v1654, %v1729
        %v1731 = vpop.f32.mrb[0].mxu0
        %1732 = vdwg.mxu0
        %1733 = vmatprep.subr.mxu0 0.0
        %v1734 = vand.u32 %v237, 4294901760
        %v1735 = vsub.f32 %v237, %v1734
        %1736 = vmatpush1.msra.mxu0 %v1735
        %1737 = vmatprep.subr.mxu0 0.0
        %1738 = vmatpush1.msra.mxu0 0.0
        %1739 = vmatprep.subr.mxu0 0.0
        %1740 = vmatpush1.msra.mxu0 0.0
        %1741 = vmatprep.subr.mxu0 0.0
        %1742 = vmatpush1.msra.mxu0 0.0
        %1743 = vmatprep.subr.mxu0 0.0
        %1744 = vmatpush1.msra.mxu0 0.0
        %1745 = vmatprep.subr.mxu0 0.0
        %1746 = vmatpush1.msra.mxu0 0.0
        %1747 = vmatprep.subr.mxu0 0.0
        %1748 = vmatpush1.msra.mxu0 0.0
        %1749 = vmatprep.subr.mxu0 0.0
        %1750 = vmatpush1.msra.mxu0 0.0
        %1751 = vmatprep.subr.mxu0 0.0
        %1752 = vmatpush1.msra.mxu0 0.0
        %1753 = vmatprep.subr.mxu0 0.0
        %1754 = vmatpush1.msra.mxu0 0.0
        %1755 = vmatprep.subr.mxu0 0.0
        %1756 = vmatpush1.msra.mxu0 0.0
        %1757 = vmatprep.subr.mxu0 0.0
        %1758 = vmatpush1.msra.mxu0 0.0
        %1759 = vmatprep.subr.mxu0 0.0
        %1760 = vmatpush1.msra.mxu0 0.0
        %1761 = vmatprep.subr.mxu0 0.0
        %1762 = vmatpush1.msra.mxu0 0.0
        %1763 = vmatprep.subr.mxu0 0.0
        %1764 = vmatpush1.msra.mxu0 0.0
        %1765 = vmatprep.subr.mxu0 0.0
        %1766 = vmatpush1.msra.mxu0 0.0
        %1767 = vmatprep.subr.mxu0 0.0
        %1768 = vmatpush1.msra.mxu0 0.0
        %1769 = vmatprep.subr.mxu0 0.0
        %1770 = vmatpush1.msra.mxu0 0.0
        %1771 = vmatprep.subr.mxu0 0.0
        %1772 = vmatpush1.msra.mxu0 0.0
        %1773 = vmatprep.subr.mxu0 0.0
        %1774 = vmatpush1.msra.mxu0 0.0
        %1775 = vmatprep.subr.mxu0 0.0
        %1776 = vmatpush1.msra.mxu0 0.0
        %1777 = vmatprep.subr.mxu0 0.0
        %1778 = vmatpush1.msra.mxu0 0.0
        %1779 = vmatprep.subr.mxu0 0.0
        %1780 = vmatpush1.msra.mxu0 0.0
        %1781 = vmatprep.subr.mxu0 0.0
        %1782 = vmatpush1.msra.mxu0 0.0
        %1783 = vmatprep.subr.mxu0 0.0
        %1784 = vmatpush1.msra.mxu0 0.0
        %1785 = vmatprep.subr.mxu0 0.0
        %1786 = vmatpush1.msra.mxu0 0.0
        %1787 = vmatprep.subr.mxu0 0.0
        %1788 = vmatpush1.msra.mxu0 0.0
        %1789 = vmatprep.subr.mxu0 0.0
        %1790 = vmatpush1.msra.mxu0 0.0
        %1791 = vmatprep.subr.mxu0 0.0
        %1792 = vmatpush1.msra.mxu0 0.0
        %1793 = vmatprep.subr.mxu0 0.0
        %1794 = vmatpush1.msra.mxu0 0.0
        %1795 = vmatprep.subr.mxu0 0.0
        %1796 = vmatpush1.msra.mxu0 0.0
        %1797 = vmatprep.subr.mxu0 0.0
        %1798 = vmatpush1.msra.mxu0 0.0
        %1799 = vmatprep.mubr.f32.mxu0 0.0
        %v1800 = vand.u32 %v241, 4294901760
        %v1801 = vsub.f32 %v241, %v1800
        %1802 = vmatmul.mubr.f32.gmra.mrb[0].mxu0 %v1801
        %v1803 = vpop.f32.mrb[0].mxu0
        %v1804 = vadd.f32 %v1730, %v1803
        %v1805 = vpop.f32.mrb[0].mxu0
        %1806 = vdwg.mxu0
        %1807 = vmatprep.subr.mxu0 0.0
        %v1808 = vand.u32 %v237, 4294901760
        %1809 = vmatpush1.msra.mxu0 %v1808
        %1810 = vmatprep.subr.mxu0 0.0
        %1811 = vmatpush1.msra.mxu0 0.0
        %1812 = vmatprep.subr.mxu0 0.0
        %1813 = vmatpush1.msra.mxu0 0.0
        %1814 = vmatprep.subr.mxu0 0.0
        %1815 = vmatpush1.msra.mxu0 0.0
        %1816 = vmatprep.subr.mxu0 0.0
        %1817 = vmatpush1.msra.mxu0 0.0
        %1818 = vmatprep.subr.mxu0 0.0
        %1819 = vmatpush1.msra.mxu0 0.0
        %1820 = vmatprep.subr.mxu0 0.0
        %1821 = vmatpush1.msra.mxu0 0.0
        %1822 = vmatprep.subr.mxu0 0.0
        %1823 = vmatpush1.msra.mxu0 0.0
        %1824 = vmatprep.subr.mxu0 0.0
        %1825 = vmatpush1.msra.mxu0 0.0
        %1826 = vmatprep.subr.mxu0 0.0
        %1827 = vmatpush1.msra.mxu0 0.0
        %1828 = vmatprep.subr.mxu0 0.0
        %1829 = vmatpush1.msra.mxu0 0.0
        %1830 = vmatprep.subr.mxu0 0.0
        %1831 = vmatpush1.msra.mxu0 0.0
        %1832 = vmatprep.subr.mxu0 0.0
        %1833 = vmatpush1.msra.mxu0 0.0
        %1834 = vmatprep.subr.mxu0 0.0
        %1835 = vmatpush1.msra.mxu0 0.0
        %1836 = vmatprep.subr.mxu0 0.0
        %1837 = vmatpush1.msra.mxu0 0.0
        %1838 = vmatprep.subr.mxu0 0.0
        %1839 = vmatpush1.msra.mxu0 0.0
        %1840 = vmatprep.subr.mxu0 0.0
        %1841 = vmatpush1.msra.mxu0 0.0
        %1842 = vmatprep.subr.mxu0 0.0
        %1843 = vmatpush1.msra.mxu0 0.0
        %1844 = vmatprep.subr.mxu0 0.0
        %1845 = vmatpush1.msra.mxu0 0.0
        %1846 = vmatprep.subr.mxu0 0.0
        %1847 = vmatpush1.msra.mxu0 0.0
        %1848 = vmatprep.subr.mxu0 0.0
        %1849 = vmatpush1.msra.mxu0 0.0
        %1850 = vmatprep.subr.mxu0 0.0
        %1851 = vmatpush1.msra.mxu0 0.0
        %1852 = vmatprep.subr.mxu0 0.0
        %1853 = vmatpush1.msra.mxu0 0.0
        %1854 = vmatprep.subr.mxu0 0.0
        %1855 = vmatpush1.msra.mxu0 0.0
        %1856 = vmatprep.subr.mxu0 0.0
        %1857 = vmatpush1.msra.mxu0 0.0
        %1858 = vmatprep.subr.mxu0 0.0
        %1859 = vmatpush1.msra.mxu0 0.0
        %1860 = vmatprep.subr.mxu0 0.0
        %1861 = vmatpush1.msra.mxu0 0.0
        %1862 = vmatprep.subr.mxu0 0.0
        %1863 = vmatpush1.msra.mxu0 0.0
        %1864 = vmatprep.subr.mxu0 0.0
        %1865 = vmatpush1.msra.mxu0 0.0
        %1866 = vmatprep.subr.mxu0 0.0
        %1867 = vmatpush1.msra.mxu0 0.0
        %1868 = vmatprep.subr.mxu0 0.0
        %1869 = vmatpush1.msra.mxu0 0.0
        %1870 = vmatprep.subr.mxu0 0.0
        %1871 = vmatpush1.msra.mxu0 0.0
        %1872 = vmatprep.mubr.f32.mxu0 0.0
        %v1873 = vand.u32 %v241, 4294901760
        %v1874 = vsub.f32 %v241, %v1873
        %v1875 = vand.u32 %v1874, 4294901760
        %1876 = vmatmul.mubr.f32.gmra.mrb[0].mxu0 %v1875
        %v1877 = vpop.f32.mrb[0].mxu0
        %v1878 = vadd.f32 %v1804, %v1877
        %v1879 = vpop.f32.mrb[0].mxu0
        %1880 = vdwg.mxu0
        %1881 = vmatprep.subr.mxu0 0.0
        %v1882 = vand.u32 %v237, 4294901760
        %v1883 = vsub.f32 %v237, %v1882
        %v1884 = vand.u32 %v1883, 4294901760
        %1885 = vmatpush1.msra.mxu0 %v1884
        %1886 = vmatprep.subr.mxu0 0.0
        %1887 = vmatpush1.msra.mxu0 0.0
        %1888 = vmatprep.subr.mxu0 0.0
        %1889 = vmatpush1.msra.mxu0 0.0
        %1890 = vmatprep.subr.mxu0 0.0
        %1891 = vmatpush1.msra.mxu0 0.0
        %1892 = vmatprep.subr.mxu0 0.0
        %1893 = vmatpush1.msra.mxu0 0.0
        %1894 = vmatprep.subr.mxu0 0.0
        %1895 = vmatpush1.msra.mxu0 0.0
        %1896 = vmatprep.subr.mxu0 0.0
        %1897 = vmatpush1.msra.mxu0 0.0
        %1898 = vmatprep.subr.mxu0 0.0
        %1899 = vmatpush1.msra.mxu0 0.0
        %1900 = vmatprep.subr.mxu0 0.0
        %1901 = vmatpush1.msra.mxu0 0.0
        %1902 = vmatprep.subr.mxu0 0.0
        %1903 = vmatpush1.msra.mxu0 0.0
        %1904 = vmatprep.subr.mxu0 0.0
        %1905 = vmatpush1.msra.mxu0 0.0
        %1906 = vmatprep.subr.mxu0 0.0
        %1907 = vmatpush1.msra.mxu0 0.0
        %1908 = vmatprep.subr.mxu0 0.0
        %1909 = vmatpush1.msra.mxu0 0.0
        %1910 = vmatprep.subr.mxu0 0.0
        %1911 = vmatpush1.msra.mxu0 0.0
        %1912 = vmatprep.subr.mxu0 0.0
        %1913 = vmatpush1.msra.mxu0 0.0
        %1914 = vmatprep.subr.mxu0 0.0
        %1915 = vmatpush1.msra.mxu0 0.0
        %1916 = vmatprep.subr.mxu0 0.0
        %1917 = vmatpush1.msra.mxu0 0.0
        %1918 = vmatprep.subr.mxu0 0.0
        %1919 = vmatpush1.msra.mxu0 0.0
        %1920 = vmatprep.subr.mxu0 0.0
        %1921 = vmatpush1.msra.mxu0 0.0
        %1922 = vmatprep.subr.mxu0 0.0
        %1923 = vmatpush1.msra.mxu0 0.0
        %1924 = vmatprep.subr.mxu0 0.0
        %1925 = vmatpush1.msra.mxu0 0.0
        %1926 = vmatprep.subr.mxu0 0.0
        %1927 = vmatpush1.msra.mxu0 0.0
        %1928 = vmatprep.subr.mxu0 0.0
        %1929 = vmatpush1.msra.mxu0 0.0
        %1930 = vmatprep.subr.mxu0 0.0
        %1931 = vmatpush1.msra.mxu0 0.0
        %1932 = vmatprep.subr.mxu0 0.0
        %1933 = vmatpush1.msra.mxu0 0.0
        %1934 = vmatprep.subr.mxu0 0.0
        %1935 = vmatpush1.msra.mxu0 0.0
        %1936 = vmatprep.subr.mxu0 0.0
        %1937 = vmatpush1.msra.mxu0 0.0
        %1938 = vmatprep.subr.mxu0 0.0
        %1939 = vmatpush1.msra.mxu0 0.0
        %1940 = vmatprep.subr.mxu0 0.0
        %1941 = vmatpush1.msra.mxu0 0.0
        %1942 = vmatprep.subr.mxu0 0.0
        %1943 = vmatpush1.msra.mxu0 0.0
        %1944 = vmatprep.subr.mxu0 0.0
        %1945 = vmatpush1.msra.mxu0 0.0
        %1946 = vmatprep.subr.mxu0 0.0
        %1947 = vmatpush1.msra.mxu0 0.0
        %1948 = vmatprep.mubr.f32.mxu0 0.0
        %v1949 = vand.u32 %v241, 4294901760
        %1950 = vmatmul.mubr.f32.gmra.mrb[0].mxu0 %v1949
        %v1951 = vpop.f32.mrb[0].mxu0
        %v1952 = vadd.f32 %v1878, %v1951
        %v1953 = vpop.f32.mrb[0].mxu0
        %1954 = vdwg.mxu0
        %1955 = vmatprep.subr.mxu0 0.0
        %v1956 = vand.u32 %v237, 4294901760
        %1957 = vmatpush1.msra.mxu0 %v1956
        %1958 = vmatprep.subr.mxu0 0.0
        %1959 = vmatpush1.msra.mxu0 0.0
        %1960 = vmatprep.subr.mxu0 0.0
        %1961 = vmatpush1.msra.mxu0 0.0
        %1962 = vmatprep.subr.mxu0 0.0
        %1963 = vmatpush1.msra.mxu0 0.0
        %1964 = vmatprep.subr.mxu0 0.0
        %1965 = vmatpush1.msra.mxu0 0.0
        %1966 = vmatprep.subr.mxu0 0.0
        %1967 = vmatpush1.msra.mxu0 0.0
        %1968 = vmatprep.subr.mxu0 0.0
        %1969 = vmatpush1.msra.mxu0 0.0
        %1970 = vmatprep.subr.mxu0 0.0
        %1971 = vmatpush1.msra.mxu0 0.0
        %1972 = vmatprep.subr.mxu0 0.0
        %1973 = vmatpush1.msra.mxu0 0.0
        %1974 = vmatprep.subr.mxu0 0.0
        %1975 = vmatpush1.msra.mxu0 0.0
        %1976 = vmatprep.subr.mxu0 0.0
        %1977 = vmatpush1.msra.mxu0 0.0
        %1978 = vmatprep.subr.mxu0 0.0
        %1979 = vmatpush1.msra.mxu0 0.0
        %1980 = vmatprep.subr.mxu0 0.0
        %1981 = vmatpush1.msra.mxu0 0.0
        %1982 = vmatprep.subr.mxu0 0.0
        %1983 = vmatpush1.msra.mxu0 0.0
        %1984 = vmatprep.subr.mxu0 0.0
        %1985 = vmatpush1.msra.mxu0 0.0
        %1986 = vmatprep.subr.mxu0 0.0
        %1987 = vmatpush1.msra.mxu0 0.0
        %1988 = vmatprep.subr.mxu0 0.0
        %1989 = vmatpush1.msra.mxu0 0.0
        %1990 = vmatprep.subr.mxu0 0.0
        %1991 = vmatpush1.msra.mxu0 0.0
        %1992 = vmatprep.subr.mxu0 0.0
        %1993 = vmatpush1.msra.mxu0 0.0
        %1994 = vmatprep.subr.mxu0 0.0
        %1995 = vmatpush1.msra.mxu0 0.0
        %1996 = vmatprep.subr.mxu0 0.0
        %1997 = vmatpush1.msra.mxu0 0.0
        %1998 = vmatprep.subr.mxu0 0.0
        %1999 = vmatpush1.msra.mxu0 0.0
        %2000 = vmatprep.subr.mxu0 0.0
        %2001 = vmatpush1.msra.mxu0 0.0
        %2002 = vmatprep.subr.mxu0 0.0
        %2003 = vmatpush1.msra.mxu0 0.0
        %2004 = vmatprep.subr.mxu0 0.0
        %2005 = vmatpush1.msra.mxu0 0.0
        %2006 = vmatprep.subr.mxu0 0.0
        %2007 = vmatpush1.msra.mxu0 0.0
        %2008 = vmatprep.subr.mxu0 0.0
        %2009 = vmatpush1.msra.mxu0 0.0
        %2010 = vmatprep.subr.mxu0 0.0
        %2011 = vmatpush1.msra.mxu0 0.0
        %2012 = vmatprep.subr.mxu0 0.0
        %2013 = vmatpush1.msra.mxu0 0.0
        %2014 = vmatprep.subr.mxu0 0.0
        %2015 = vmatpush1.msra.mxu0 0.0
        %2016 = vmatprep.subr.mxu0 0.0
        %2017 = vmatpush1.msra.mxu0 0.0
        %2018 = vmatprep.subr.mxu0 0.0
        %2019 = vmatpush1.msra.mxu0 0.0
        %2020 = vmatprep.mubr.f32.mxu0 0.0
        %v2021 = vand.u32 %v241, 4294901760
        %2022 = vmatmul.mubr.f32.gmra.mrb[0].mxu0 %v2021
        %v2023 = vpop.f32.mrb[0].mxu0
        %v2024 = vadd.f32 %v1952, %v2023
        %v2025 = vpop.f32.mrb[0].mxu0
        %2026 = vdwg.mxu0
        %v2027 = vld [vmem:[#allocation7] sm:$0xff]
        %v2029 = vsel %vm239, %v686, 0
        %v2032 = vsel %vm239, %v1132, 0
        %v2035 = vsel %vm239, %v1578, 0
        %v2038 = vsel %vm239, %v2024, 0
        %2040 = vmatprep.subr.mxu0 0.0
        %v2041 = vand.u32 %v2027, 4294901760
        %2042 = vmatpush1.msra.mxu0 %v2041
        %2043 = vmatprep.subr.mxu0 0.0
        %2044 = vmatpush1.msra.mxu0 0.0
        %2045 = vmatprep.subr.mxu0 0.0
        %2046 = vmatpush1.msra.mxu0 0.0
        %2047 = vmatprep.subr.mxu0 0.0
        %2048 = vmatpush1.msra.mxu0 0.0
        %2049 = vmatprep.subr.mxu0 0.0
        %2050 = vmatpush1.msra.mxu0 0.0
        %2051 = vmatprep.subr.mxu0 0.0
        %2052 = vmatpush1.msra.mxu0 0.0
        %2053 = vmatprep.subr.mxu0 0.0
        %2054 = vmatpush1.msra.mxu0 0.0
        %2055 = vmatprep.subr.mxu0 0.0
        %2056 = vmatpush1.msra.mxu0 0.0
        %2057 = vmatprep.subr.mxu0 0.0
        %2058 = vmatpush1.msra.mxu0 0.0
        %2059 = vmatprep.subr.mxu0 0.0
        %2060 = vmatpush1.msra.mxu0 0.0
        %2061 = vmatprep.subr.mxu0 0.0
        %2062 = vmatpush1.msra.mxu0 0.0
        %2063 = vmatprep.subr.mxu0 0.0
        %2064 = vmatpush1.msra.mxu0 0.0
        %2065 = vmatprep.subr.mxu0 0.0
        %2066 = vmatpush1.msra.mxu0 0.0
        %2067 = vmatprep.subr.mxu0 0.0
        %2068 = vmatpush1.msra.mxu0 0.0
        %2069 = vmatprep.subr.mxu0 0.0
        %2070 = vmatpush1.msra.mxu0 0.0
        %2071 = vmatprep.subr.mxu0 0.0
        %2072 = vmatpush1.msra.mxu0 0.0
        %2073 = vmatprep.subr.mxu0 0.0
        %2074 = vmatpush1.msra.mxu0 0.0
        %2075 = vmatprep.subr.mxu0 0.0
        %2076 = vmatpush1.msra.mxu0 0.0
        %2077 = vmatprep.subr.mxu0 0.0
        %2078 = vmatpush1.msra.mxu0 0.0
        %2079 = vmatprep.subr.mxu0 0.0
        %2080 = vmatpush1.msra.mxu0 0.0
        %2081 = vmatprep.subr.mxu0 0.0
        %2082 = vmatpush1.msra.mxu0 0.0
        %2083 = vmatprep.subr.mxu0 0.0
        %2084 = vmatpush1.msra.mxu0 0.0
        %2085 = vmatprep.subr.mxu0 0.0
        %2086 = vmatpush1.msra.mxu0 0.0
        %2087 = vmatprep.subr.mxu0 0.0
        %2088 = vmatpush1.msra.mxu0 0.0
        %2089 = vmatprep.subr.mxu0 0.0
        %2090 = vmatpush1.msra.mxu0 0.0
        %2091 = vmatprep.subr.mxu0 0.0
        %2092 = vmatpush1.msra.mxu0 0.0
        %2093 = vmatprep.subr.mxu0 0.0
        %2094 = vmatpush1.msra.mxu0 0.0
        %2095 = vmatprep.subr.mxu0 0.0
        %2096 = vmatpush1.msra.mxu0 0.0
        %2097 = vmatprep.subr.mxu0 0.0
        %2098 = vmatpush1.msra.mxu0 0.0
        %2099 = vmatprep.subr.mxu0 0.0
        %2100 = vmatpush1.msra.mxu0 0.0
        %2101 = vmatprep.subr.mxu0 0.0
        %2102 = vmatpush1.msra.mxu0 0.0
        %2103 = vmatprep.subr.mxu0 0.0
        %2104 = vmatpush1.msra.mxu0 0.0
        %2105 = vmatprep.mubr.f32.mxu0 0.0
        %v2106 = vand.u32 %v2029, 4294901760
        %v2107 = vsub.f32 %v2029, %v2106
        %v2108 = vand.u32 %v2107, 4294901760
        %v2109 = vsub.f32 %v2107, %v2108
        %v2110 = vand.u32 %v2109, 4294901760
        %2111 = vmatmul.mubr.f32.gmra.mrb[0].mxu0 %v2110
        %v2112 = vpop.f32.mrb[0].mxu0
        %v2113 = vadd.f32 0.0, %v2112
        %v2114 = vpop.f32.mrb[0].mxu0
        %2115 = vmatprep.mubr.f32.mxu0 0.0
        %v2116 = vand.u32 %v2032, 4294901760
        %v2117 = vsub.f32 %v2032, %v2116
        %v2118 = vand.u32 %v2117, 4294901760
        %v2119 = vsub.f32 %v2117, %v2118
        %v2120 = vand.u32 %v2119, 4294901760
        %2121 = vmatmul.mubr.f32.gmra.mrb[0].mxu0 %v2120
        %v2122 = vpop.f32.mrb[0].mxu0
        %v2123 = vadd.f32 0.0, %v2122
        %v2124 = vpop.f32.mrb[0].mxu0
        %2125 = vmatprep.mubr.f32.mxu0 0.0
        %v2126 = vand.u32 %v2035, 4294901760
        %v2127 = vsub.f32 %v2035, %v2126
        %v2128 = vand.u32 %v2127, 4294901760
        %v2129 = vsub.f32 %v2127, %v2128
        %v2130 = vand.u32 %v2129, 4294901760
        %2131 = vmatmul.mubr.f32.gmra.mrb[0].mxu0 %v2130
        %v2132 = vpop.f32.mrb[0].mxu0
        %v2133 = vadd.f32 0.0, %v2132
        %v2134 = vpop.f32.mrb[0].mxu0
        %2135 = vmatprep.mubr.f32.mxu0 0.0
        %v2136 = vand.u32 %v2038, 4294901760
        %v2137 = vsub.f32 %v2038, %v2136
        %v2138 = vand.u32 %v2137, 4294901760
        %v2139 = vsub.f32 %v2137, %v2138
        %v2140 = vand.u32 %v2139, 4294901760
        %2141 = vmatmul.mubr.f32.gmra.mrb[0].mxu0 %v2140
        %v2142 = vpop.f32.mrb[0].mxu0
        %v2143 = vadd.f32 0.0, %v2142
        %v2144 = vpop.f32.mrb[0].mxu0
        %2145 = vdwg.mxu0
        %2146 = vmatprep.subr.mxu0 0.0
        %v2147 = vand.u32 %v2027, 4294901760
        %v2148 = vsub.f32 %v2027, %v2147
        %v2149 = vand.u32 %v2148, 4294901760
        %v2150 = vsub.f32 %v2148, %v2149
        %v2151 = vand.u32 %v2150, 4294901760
        %2152 = vmatpush1.msra.mxu0 %v2151
        %2153 = vmatprep.subr.mxu0 0.0
        %2154 = vmatpush1.msra.mxu0 0.0
        %2155 = vmatprep.subr.mxu0 0.0
        %2156 = vmatpush1.msra.mxu0 0.0
        %2157 = vmatprep.subr.mxu0 0.0
        %2158 = vmatpush1.msra.mxu0 0.0
        %2159 = vmatprep.subr.mxu0 0.0
        %2160 = vmatpush1.msra.mxu0 0.0
        %2161 = vmatprep.subr.mxu0 0.0
        %2162 = vmatpush1.msra.mxu0 0.0
        %2163 = vmatprep.subr.mxu0 0.0
        %2164 = vmatpush1.msra.mxu0 0.0
        %2165 = vmatprep.subr.mxu0 0.0
        %2166 = vmatpush1.msra.mxu0 0.0
        %2167 = vmatprep.subr.mxu0 0.0
        %2168 = vmatpush1.msra.mxu0 0.0
        %2169 = vmatprep.subr.mxu0 0.0
        %2170 = vmatpush1.msra.mxu0 0.0
        %2171 = vmatprep.subr.mxu0 0.0
        %2172 = vmatpush1.msra.mxu0 0.0
        %2173 = vmatprep.subr.mxu0 0.0
        %2174 = vmatpush1.msra.mxu0 0.0
        %2175 = vmatprep.subr.mxu0 0.0
        %2176 = vmatpush1.msra.mxu0 0.0
        %2177 = vmatprep.subr.mxu0 0.0
        %2178 = vmatpush1.msra.mxu0 0.0
        %2179 = vmatprep.subr.mxu0 0.0
        %2180 = vmatpush1.msra.mxu0 0.0
        %2181 = vmatprep.subr.mxu0 0.0
        %2182 = vmatpush1.msra.mxu0 0.0
        %2183 = vmatprep.subr.mxu0 0.0
        %2184 = vmatpush1.msra.mxu0 0.0
        %2185 = vmatprep.subr.mxu0 0.0
        %2186 = vmatpush1.msra.mxu0 0.0
        %2187 = vmatprep.subr.mxu0 0.0
        %2188 = vmatpush1.msra.mxu0 0.0
        %2189 = vmatprep.subr.mxu0 0.0
        %2190 = vmatpush1.msra.mxu0 0.0
        %2191 = vmatprep.subr.mxu0 0.0
        %2192 = vmatpush1.msra.mxu0 0.0
        %2193 = vmatprep.subr.mxu0 0.0
        %2194 = vmatpush1.msra.mxu0 0.0
        %2195 = vmatprep.subr.mxu0 0.0
        %2196 = vmatpush1.msra.mxu0 0.0
        %2197 = vmatprep.subr.mxu0 0.0
        %2198 = vmatpush1.msra.mxu0 0.0
        %2199 = vmatprep.subr.mxu0 0.0
        %2200 = vmatpush1.msra.mxu0 0.0
        %2201 = vmatprep.subr.mxu0 0.0
        %2202 = vmatpush1.msra.mxu0 0.0
        %2203 = vmatprep.subr.mxu0 0.0
        %2204 = vmatpush1.msra.mxu0 0.0
        %2205 = vmatprep.subr.mxu0 0.0
        %2206 = vmatpush1.msra.mxu0 0.0
        %2207 = vmatprep.subr.mxu0 0.0
        %2208 = vmatpush1.msra.mxu0 0.0
        %2209 = vmatprep.subr.mxu0 0.0
        %2210 = vmatpush1.msra.mxu0 0.0
        %2211 = vmatprep.subr.mxu0 0.0
        %2212 = vmatpush1.msra.mxu0 0.0
        %2213 = vmatprep.subr.mxu0 0.0
        %2214 = vmatpush1.msra.mxu0 0.0
        %2215 = vmatprep.mubr.f32.mxu0 0.0
        %v2216 = vand.u32 %v2029, 4294901760
        %2217 = vmatmul.mubr.f32.gmra.mrb[0].mxu0 %v2216
        %v2218 = vpop.f32.mrb[0].mxu0
        %v2219 = vadd.f32 %v2113, %v2218
        %v2220 = vpop.f32.mrb[0].mxu0
        %2221 = vmatprep.mubr.f32.mxu0 0.0
        %v2222 = vand.u32 %v2032, 4294901760
        %2223 = vmatmul.mubr.f32.gmra.mrb[0].mxu0 %v2222
        %v2224 = vpop.f32.mrb[0].mxu0
        %v2225 = vadd.f32 %v2123, %v2224
        %v2226 = vpop.f32.mrb[0].mxu0
        %2227 = vmatprep.mubr.f32.mxu0 0.0
        %v2228 = vand.u32 %v2035, 4294901760
        %2229 = vmatmul.mubr.f32.gmra.mrb[0].mxu0 %v2228
        %v2230 = vpop.f32.mrb[0].mxu0
        %v2231 = vadd.f32 %v2133, %v2230
        %v2232 = vpop.f32.mrb[0].mxu0
        %2233 = vmatprep.mubr.f32.mxu0 0.0
        %v2234 = vand.u32 %v2038, 4294901760
        %2235 = vmatmul.mubr.f32.gmra.mrb[0].mxu0 %v2234
        %v2236 = vpop.f32.mrb[0].mxu0
        %v2237 = vadd.f32 %v2143, %v2236
        %v2238 = vpop.f32.mrb[0].mxu0
        %2239 = vdwg.mxu0
        %2240 = vmatprep.subr.mxu0 0.0
        %v2241 = vand.u32 %v2027, 4294901760
        %v2242 = vsub.f32 %v2027, %v2241
        %2243 = vmatpush1.msra.mxu0 %v2242
        %2244 = vmatprep.subr.mxu0 0.0
        %2245 = vmatpush1.msra.mxu0 0.0
        %2246 = vmatprep.subr.mxu0 0.0
        %2247 = vmatpush1.msra.mxu0 0.0
        %2248 = vmatprep.subr.mxu0 0.0
        %2249 = vmatpush1.msra.mxu0 0.0
        %2250 = vmatprep.subr.mxu0 0.0
        %2251 = vmatpush1.msra.mxu0 0.0
        %2252 = vmatprep.subr.mxu0 0.0
        %2253 = vmatpush1.msra.mxu0 0.0
        %2254 = vmatprep.subr.mxu0 0.0
        %2255 = vmatpush1.msra.mxu0 0.0
        %2256 = vmatprep.subr.mxu0 0.0
        %2257 = vmatpush1.msra.mxu0 0.0
        %2258 = vmatprep.subr.mxu0 0.0
        %2259 = vmatpush1.msra.mxu0 0.0
        %2260 = vmatprep.subr.mxu0 0.0
        %2261 = vmatpush1.msra.mxu0 0.0
        %2262 = vmatprep.subr.mxu0 0.0
        %2263 = vmatpush1.msra.mxu0 0.0
        %2264 = vmatprep.subr.mxu0 0.0
        %2265 = vmatpush1.msra.mxu0 0.0
        %2266 = vmatprep.subr.mxu0 0.0
        %2267 = vmatpush1.msra.mxu0 0.0
        %2268 = vmatprep.subr.mxu0 0.0
        %2269 = vmatpush1.msra.mxu0 0.0
        %2270 = vmatprep.subr.mxu0 0.0
        %2271 = vmatpush1.msra.mxu0 0.0
        %2272 = vmatprep.subr.mxu0 0.0
        %2273 = vmatpush1.msra.mxu0 0.0
        %2274 = vmatprep.subr.mxu0 0.0
        %2275 = vmatpush1.msra.mxu0 0.0
        %2276 = vmatprep.subr.mxu0 0.0
        %2277 = vmatpush1.msra.mxu0 0.0
        %2278 = vmatprep.subr.mxu0 0.0
        %2279 = vmatpush1.msra.mxu0 0.0
        %2280 = vmatprep.subr.mxu0 0.0
        %2281 = vmatpush1.msra.mxu0 0.0
        %2282 = vmatprep.subr.mxu0 0.0
        %2283 = vmatpush1.msra.mxu0 0.0
        %2284 = vmatprep.subr.mxu0 0.0
        %2285 = vmatpush1.msra.mxu0 0.0
        %2286 = vmatprep.subr.mxu0 0.0
        %2287 = vmatpush1.msra.mxu0 0.0
        %2288 = vmatprep.subr.mxu0 0.0
        %2289 = vmatpush1.msra.mxu0 0.0
        %2290 = vmatprep.subr.mxu0 0.0
        %2291 = vmatpush1.msra.mxu0 0.0
        %2292 = vmatprep.subr.mxu0 0.0
        %2293 = vmatpush1.msra.mxu0 0.0
        %2294 = vmatprep.subr.mxu0 0.0
        %2295 = vmatpush1.msra.mxu0 0.0
        %2296 = vmatprep.subr.mxu0 0.0
        %2297 = vmatpush1.msra.mxu0 0.0
        %2298 = vmatprep.subr.mxu0 0.0
        %2299 = vmatpush1.msra.mxu0 0.0
        %2300 = vmatprep.subr.mxu0 0.0
        %2301 = vmatpush1.msra.mxu0 0.0
        %2302 = vmatprep.subr.mxu0 0.0
        %2303 = vmatpush1.msra.mxu0 0.0
        %2304 = vmatprep.subr.mxu0 0.0
        %2305 = vmatpush1.msra.mxu0 0.0
        %2306 = vmatprep.mubr.f32.mxu0 0.0
        %v2307 = vand.u32 %v2029, 4294901760
        %v2308 = vsub.f32 %v2029, %v2307
        %2309 = vmatmul.mubr.f32.gmra.mrb[0].mxu0 %v2308
        %v2310 = vpop.f32.mrb[0].mxu0
        %v2311 = vadd.f32 %v2219, %v2310
        %v2312 = vpop.f32.mrb[0].mxu0
        %2313 = vmatprep.mubr.f32.mxu0 0.0
        %v2314 = vand.u32 %v2032, 4294901760
        %v2315 = vsub.f32 %v2032, %v2314
        %2316 = vmatmul.mubr.f32.gmra.mrb[0].mxu0 %v2315
        %v2317 = vpop.f32.mrb[0].mxu0
        %v2318 = vadd.f32 %v2225, %v2317
        %v2319 = vpop.f32.mrb[0].mxu0
        %2320 = vmatprep.mubr.f32.mxu0 0.0
        %v2321 = vand.u32 %v2035, 4294901760
        %v2322 = vsub.f32 %v2035, %v2321
        %2323 = vmatmul.mubr.f32.gmra.mrb[0].mxu0 %v2322
        %v2324 = vpop.f32.mrb[0].mxu0
        %v2325 = vadd.f32 %v2231, %v2324
        %v2326 = vpop.f32.mrb[0].mxu0
        %2327 = vmatprep.mubr.f32.mxu0 0.0
        %v2328 = vand.u32 %v2038, 4294901760
        %v2329 = vsub.f32 %v2038, %v2328
        %2330 = vmatmul.mubr.f32.gmra.mrb[0].mxu0 %v2329
        %v2331 = vpop.f32.mrb[0].mxu0
        %v2332 = vadd.f32 %v2237, %v2331
        %v2333 = vpop.f32.mrb[0].mxu0
        %2334 = vdwg.mxu0
        %2335 = vmatprep.subr.mxu0 0.0
        %v2336 = vand.u32 %v2027, 4294901760
        %2337 = vmatpush1.msra.mxu0 %v2336
        %2338 = vmatprep.subr.mxu0 0.0
        %2339 = vmatpush1.msra.mxu0 0.0
        %2340 = vmatprep.subr.mxu0 0.0
        %2341 = vmatpush1.msra.mxu0 0.0
        %2342 = vmatprep.subr.mxu0 0.0
        %2343 = vmatpush1.msra.mxu0 0.0
        %2344 = vmatprep.subr.mxu0 0.0
        %2345 = vmatpush1.msra.mxu0 0.0
        %2346 = vmatprep.subr.mxu0 0.0
        %2347 = vmatpush1.msra.mxu0 0.0
        %2348 = vmatprep.subr.mxu0 0.0
        %2349 = vmatpush1.msra.mxu0 0.0
        %2350 = vmatprep.subr.mxu0 0.0
        %2351 = vmatpush1.msra.mxu0 0.0
        %2352 = vmatprep.subr.mxu0 0.0
        %2353 = vmatpush1.msra.mxu0 0.0
        %2354 = vmatprep.subr.mxu0 0.0
        %2355 = vmatpush1.msra.mxu0 0.0
        %2356 = vmatprep.subr.mxu0 0.0
        %2357 = vmatpush1.msra.mxu0 0.0
        %2358 = vmatprep.subr.mxu0 0.0
        %2359 = vmatpush1.msra.mxu0 0.0
        %2360 = vmatprep.subr.mxu0 0.0
        %2361 = vmatpush1.msra.mxu0 0.0
        %2362 = vmatprep.subr.mxu0 0.0
        %2363 = vmatpush1.msra.mxu0 0.0
        %2364 = vmatprep.subr.mxu0 0.0
        %2365 = vmatpush1.msra.mxu0 0.0
        %2366 = vmatprep.subr.mxu0 0.0
        %2367 = vmatpush1.msra.mxu0 0.0
        %2368 = vmatprep.subr.mxu0 0.0
        %2369 = vmatpush1.msra.mxu0 0.0
        %2370 = vmatprep.subr.mxu0 0.0
        %2371 = vmatpush1.msra.mxu0 0.0
        %2372 = vmatprep.subr.mxu0 0.0
        %2373 = vmatpush1.msra.mxu0 0.0
        %2374 = vmatprep.subr.mxu0 0.0
        %2375 = vmatpush1.msra.mxu0 0.0
        %2376 = vmatprep.subr.mxu0 0.0
        %2377 = vmatpush1.msra.mxu0 0.0
        %2378 = vmatprep.subr.mxu0 0.0
        %2379 = vmatpush1.msra.mxu0 0.0
        %2380 = vmatprep.subr.mxu0 0.0
        %2381 = vmatpush1.msra.mxu0 0.0
        %2382 = vmatprep.subr.mxu0 0.0
        %2383 = vmatpush1.msra.mxu0 0.0
        %2384 = vmatprep.subr.mxu0 0.0
        %2385 = vmatpush1.msra.mxu0 0.0
        %2386 = vmatprep.subr.mxu0 0.0
        %2387 = vmatpush1.msra.mxu0 0.0
        %2388 = vmatprep.subr.mxu0 0.0
        %2389 = vmatpush1.msra.mxu0 0.0
        %2390 = vmatprep.subr.mxu0 0.0
        %2391 = vmatpush1.msra.mxu0 0.0
        %2392 = vmatprep.subr.mxu0 0.0
        %2393 = vmatpush1.msra.mxu0 0.0
        %2394 = vmatprep.subr.mxu0 0.0
        %2395 = vmatpush1.msra.mxu0 0.0
        %2396 = vmatprep.subr.mxu0 0.0
        %2397 = vmatpush1.msra.mxu0 0.0
        %2398 = vmatprep.subr.mxu0 0.0
        %2399 = vmatpush1.msra.mxu0 0.0
        %2400 = vmatprep.mubr.f32.mxu0 0.0
        %v2401 = vand.u32 %v2029, 4294901760
        %v2402 = vsub.f32 %v2029, %v2401
        %v2403 = vand.u32 %v2402, 4294901760
        %2404 = vmatmul.mubr.f32.gmra.mrb[0].mxu0 %v2403
        %v2405 = vpop.f32.mrb[0].mxu0
        %v2406 = vadd.f32 %v2311, %v2405
        %v2407 = vpop.f32.mrb[0].mxu0
        %2408 = vmatprep.mubr.f32.mxu0 0.0
        %v2409 = vand.u32 %v2032, 4294901760
        %v2410 = vsub.f32 %v2032, %v2409
        %v2411 = vand.u32 %v2410, 4294901760
        %2412 = vmatmul.mubr.f32.gmra.mrb[0].mxu0 %v2411
        %v2413 = vpop.f32.mrb[0].mxu0
        %v2414 = vadd.f32 %v2318, %v2413
        %v2415 = vpop.f32.mrb[0].mxu0
        %2416 = vmatprep.mubr.f32.mxu0 0.0
        %v2417 = vand.u32 %v2035, 4294901760
        %v2418 = vsub.f32 %v2035, %v2417
        %v2419 = vand.u32 %v2418, 4294901760
        %2420 = vmatmul.mubr.f32.gmra.mrb[0].mxu0 %v2419
        %v2421 = vpop.f32.mrb[0].mxu0
        %v2422 = vadd.f32 %v2325, %v2421
        %v2423 = vpop.f32.mrb[0].mxu0
        %2424 = vmatprep.mubr.f32.mxu0 0.0
        %v2425 = vand.u32 %v2038, 4294901760
        %v2426 = vsub.f32 %v2038, %v2425
        %v2427 = vand.u32 %v2426, 4294901760
        %2428 = vmatmul.mubr.f32.gmra.mrb[0].mxu0 %v2427
        %v2429 = vpop.f32.mrb[0].mxu0
        %v2430 = vadd.f32 %v2332, %v2429
        %v2431 = vpop.f32.mrb[0].mxu0
        %2432 = vdwg.mxu0
        %2433 = vmatprep.subr.mxu0 0.0
        %v2434 = vand.u32 %v2027, 4294901760
        %v2435 = vsub.f32 %v2027, %v2434
        %v2436 = vand.u32 %v2435, 4294901760
        %2437 = vmatpush1.msra.mxu0 %v2436
        %2438 = vmatprep.subr.mxu0 0.0
        %2439 = vmatpush1.msra.mxu0 0.0
        %2440 = vmatprep.subr.mxu0 0.0
        %2441 = vmatpush1.msra.mxu0 0.0
        %2442 = vmatprep.subr.mxu0 0.0
        %2443 = vmatpush1.msra.mxu0 0.0
        %2444 = vmatprep.subr.mxu0 0.0
        %2445 = vmatpush1.msra.mxu0 0.0
        %2446 = vmatprep.subr.mxu0 0.0
        %2447 = vmatpush1.msra.mxu0 0.0
        %2448 = vmatprep.subr.mxu0 0.0
        %2449 = vmatpush1.msra.mxu0 0.0
        %2450 = vmatprep.subr.mxu0 0.0
        %2451 = vmatpush1.msra.mxu0 0.0
        %2452 = vmatprep.subr.mxu0 0.0
        %2453 = vmatpush1.msra.mxu0 0.0
        %2454 = vmatprep.subr.mxu0 0.0
        %2455 = vmatpush1.msra.mxu0 0.0
        %2456 = vmatprep.subr.mxu0 0.0
        %2457 = vmatpush1.msra.mxu0 0.0
        %2458 = vmatprep.subr.mxu0 0.0
        %2459 = vmatpush1.msra.mxu0 0.0
        %2460 = vmatprep.subr.mxu0 0.0
        %2461 = vmatpush1.msra.mxu0 0.0
        %2462 = vmatprep.subr.mxu0 0.0
        %2463 = vmatpush1.msra.mxu0 0.0
        %2464 = vmatprep.subr.mxu0 0.0
        %2465 = vmatpush1.msra.mxu0 0.0
        %2466 = vmatprep.subr.mxu0 0.0
        %2467 = vmatpush1.msra.mxu0 0.0
        %2468 = vmatprep.subr.mxu0 0.0
        %2469 = vmatpush1.msra.mxu0 0.0
        %2470 = vmatprep.subr.mxu0 0.0
        %2471 = vmatpush1.msra.mxu0 0.0
        %2472 = vmatprep.subr.mxu0 0.0
        %2473 = vmatpush1.msra.mxu0 0.0
        %2474 = vmatprep.subr.mxu0 0.0
        %2475 = vmatpush1.msra.mxu0 0.0
        %2476 = vmatprep.subr.mxu0 0.0
        %2477 = vmatpush1.msra.mxu0 0.0
        %2478 = vmatprep.subr.mxu0 0.0
        %2479 = vmatpush1.msra.mxu0 0.0
        %2480 = vmatprep.subr.mxu0 0.0
        %2481 = vmatpush1.msra.mxu0 0.0
        %2482 = vmatprep.subr.mxu0 0.0
        %2483 = vmatpush1.msra.mxu0 0.0
        %2484 = vmatprep.subr.mxu0 0.0
        %2485 = vmatpush1.msra.mxu0 0.0
        %2486 = vmatprep.subr.mxu0 0.0
        %2487 = vmatpush1.msra.mxu0 0.0
        %2488 = vmatprep.subr.mxu0 0.0
        %2489 = vmatpush1.msra.mxu0 0.0
        %2490 = vmatprep.subr.mxu0 0.0
        %2491 = vmatpush1.msra.mxu0 0.0
        %2492 = vmatprep.subr.mxu0 0.0
        %2493 = vmatpush1.msra.mxu0 0.0
        %2494 = vmatprep.subr.mxu0 0.0
        %2495 = vmatpush1.msra.mxu0 0.0
        %2496 = vmatprep.subr.mxu0 0.0
        %2497 = vmatpush1.msra.mxu0 0.0
        %2498 = vmatprep.subr.mxu0 0.0
        %2499 = vmatpush1.msra.mxu0 0.0
        %2500 = vmatprep.mubr.f32.mxu0 0.0
        %v2501 = vand.u32 %v2029, 4294901760
        %2502 = vmatmul.mubr.f32.gmra.mrb[0].mxu0 %v2501
        %v2503 = vpop.f32.mrb[0].mxu0
        %v2504 = vadd.f32 %v2406, %v2503
        %v2505 = vpop.f32.mrb[0].mxu0
        %2506 = vmatprep.mubr.f32.mxu0 0.0
        %v2507 = vand.u32 %v2032, 4294901760
        %2508 = vmatmul.mubr.f32.gmra.mrb[0].mxu0 %v2507
        %v2509 = vpop.f32.mrb[0].mxu0
        %v2510 = vadd.f32 %v2414, %v2509
        %v2511 = vpop.f32.mrb[0].mxu0
        %2512 = vmatprep.mubr.f32.mxu0 0.0
        %v2513 = vand.u32 %v2035, 4294901760
        %2514 = vmatmul.mubr.f32.gmra.mrb[0].mxu0 %v2513
        %v2515 = vpop.f32.mrb[0].mxu0
        %v2516 = vadd.f32 %v2422, %v2515
        %v2517 = vpop.f32.mrb[0].mxu0
        %2518 = vmatprep.mubr.f32.mxu0 0.0
        %v2519 = vand.u32 %v2038, 4294901760
        %2520 = vmatmul.mubr.f32.gmra.mrb[0].mxu0 %v2519
        %v2521 = vpop.f32.mrb[0].mxu0
        %v2522 = vadd.f32 %v2430, %v2521
        %v2523 = vpop.f32.mrb[0].mxu0
        %2524 = vdwg.mxu0
        %2525 = vmatprep.subr.mxu0 0.0
        %v2526 = vand.u32 %v2027, 4294901760
        %2527 = vmatpush1.msra.mxu0 %v2526
        %2528 = vmatprep.subr.mxu0 0.0
        %2529 = vmatpush1.msra.mxu0 0.0
        %2530 = vmatprep.subr.mxu0 0.0
        %2531 = vmatpush1.msra.mxu0 0.0
        %2532 = vmatprep.subr.mxu0 0.0
        %2533 = vmatpush1.msra.mxu0 0.0
        %2534 = vmatprep.subr.mxu0 0.0
        %2535 = vmatpush1.msra.mxu0 0.0
        %2536 = vmatprep.subr.mxu0 0.0
        %2537 = vmatpush1.msra.mxu0 0.0
        %2538 = vmatprep.subr.mxu0 0.0
        %2539 = vmatpush1.msra.mxu0 0.0
        %2540 = vmatprep.subr.mxu0 0.0
        %2541 = vmatpush1.msra.mxu0 0.0
        %2542 = vmatprep.subr.mxu0 0.0
        %2543 = vmatpush1.msra.mxu0 0.0
        %2544 = vmatprep.subr.mxu0 0.0
        %2545 = vmatpush1.msra.mxu0 0.0
        %2546 = vmatprep.subr.mxu0 0.0
        %2547 = vmatpush1.msra.mxu0 0.0
        %2548 = vmatprep.subr.mxu0 0.0
        %2549 = vmatpush1.msra.mxu0 0.0
        %2550 = vmatprep.subr.mxu0 0.0
        %2551 = vmatpush1.msra.mxu0 0.0
        %2552 = vmatprep.subr.mxu0 0.0
        %2553 = vmatpush1.msra.mxu0 0.0
        %2554 = vmatprep.subr.mxu0 0.0
        %2555 = vmatpush1.msra.mxu0 0.0
        %2556 = vmatprep.subr.mxu0 0.0
        %2557 = vmatpush1.msra.mxu0 0.0
        %2558 = vmatprep.subr.mxu0 0.0
        %2559 = vmatpush1.msra.mxu0 0.0
        %2560 = vmatprep.subr.mxu0 0.0
        %2561 = vmatpush1.msra.mxu0 0.0
        %2562 = vmatprep.subr.mxu0 0.0
        %2563 = vmatpush1.msra.mxu0 0.0
        %2564 = vmatprep.subr.mxu0 0.0
        %2565 = vmatpush1.msra.mxu0 0.0
        %2566 = vmatprep.subr.mxu0 0.0
        %2567 = vmatpush1.msra.mxu0 0.0
        %2568 = vmatprep.subr.mxu0 0.0
        %2569 = vmatpush1.msra.mxu0 0.0
        %2570 = vmatprep.subr.mxu0 0.0
        %2571 = vmatpush1.msra.mxu0 0.0
        %2572 = vmatprep.subr.mxu0 0.0
        %2573 = vmatpush1.msra.mxu0 0.0
        %2574 = vmatprep.subr.mxu0 0.0
        %2575 = vmatpush1.msra.mxu0 0.0
        %2576 = vmatprep.subr.mxu0 0.0
        %2577 = vmatpush1.msra.mxu0 0.0
        %2578 = vmatprep.subr.mxu0 0.0
        %2579 = vmatpush1.msra.mxu0 0.0
        %2580 = vmatprep.subr.mxu0 0.0
        %2581 = vmatpush1.msra.mxu0 0.0
        %2582 = vmatprep.subr.mxu0 0.0
        %2583 = vmatpush1.msra.mxu0 0.0
        %2584 = vmatprep.subr.mxu0 0.0
        %2585 = vmatpush1.msra.mxu0 0.0
        %2586 = vmatprep.subr.mxu0 0.0
        %2587 = vmatpush1.msra.mxu0 0.0
        %2588 = vmatprep.subr.mxu0 0.0
        %2589 = vmatpush1.msra.mxu0 0.0
        %2590 = vmatprep.mubr.f32.mxu0 0.0
        %v2591 = vand.u32 %v2029, 4294901760
        %2592 = vmatmul.mubr.f32.gmra.mrb[0].mxu0 %v2591
        %v2593 = vpop.f32.mrb[0].mxu0
        %v2594 = vadd.f32 %v2504, %v2593
        %v2595 = vpop.f32.mrb[0].mxu0
        %2596 = vmatprep.mubr.f32.mxu0 0.0
        %v2597 = vand.u32 %v2032, 4294901760
        %2598 = vmatmul.mubr.f32.gmra.mrb[0].mxu0 %v2597
        %v2599 = vpop.f32.mrb[0].mxu0
        %v2600 = vadd.f32 %v2510, %v2599
        %v2601 = vpop.f32.mrb[0].mxu0
        %2602 = vmatprep.mubr.f32.mxu0 0.0
        %v2603 = vand.u32 %v2035, 4294901760
        %2604 = vmatmul.mubr.f32.gmra.mrb[0].mxu0 %v2603
        %v2605 = vpop.f32.mrb[0].mxu0
        %v2606 = vadd.f32 %v2516, %v2605
        %v2607 = vpop.f32.mrb[0].mxu0
        %2608 = vmatprep.mubr.f32.mxu0 0.0
        %v2609 = vand.u32 %v2038, 4294901760
        %2610 = vmatmul.mubr.f32.gmra.mrb[0].mxu0 %v2609
        %v2611 = vpop.f32.mrb[0].mxu0
        %v2612 = vadd.f32 %v2522, %v2611
        %v2613 = vpop.f32.mrb[0].mxu0
        %2614 = vdwg.mxu0
        %2615 = vst.msk [vmem:[%s231] sm:$0xff] %vm239, %v2594
        %2616 = vst.msk [vmem:[%s231 + $0x8] sm:$0xff] %vm239, %v2600
        %2617 = vst.msk [vmem:[%s231 + $0x10] sm:$0xff] %vm239, %v2606
        %2618 = vst.msk [vmem:[%s231 + $0x18] sm:$0xff] %vm239, %v2612
        %s2619 = sand.u32 %s113, 1
        %s2620 = scalar_lea.sflag [#allocation4], %s2619
        %s2621 = sand.u32 %s113, 1
        %s2622 = smul.addr %s2621, 32
        %s2623 = scalar_lea.vmem [#allocation8], %s2622
        // Predicated region
        $region45: #{tpu_custom_call.1} parent=31 // pred_check
          %p2624 = pneg %p123
        $region46: #{tpu_custom_call.1} parent=31 // pred_check_branch
          %2626 = sbr.rel (%p2624) target = $region48
        $region47: #{tpu_custom_call.1} parent=31 // pred_region
          %s2627 = smul.u32 4, %s26
          %s2629 = ssub.s32 512, 512
          %2630 = vsyncadd %s2620, %s2629
          %s2631 = smul.addr %s25, 4
          %s2632 = sadd.s32 %s2627, %s2631
          %s2633 = smul.addr %s2632, 128
          %s2634 = scalar_lea.hbm %s3, %s2633
          %s2635 = sshll.u32 %s2623, 4
          %s2636 = int_to_ptr.vmem [resolvable:$true] %s2635
          %2641 = dma.vmem_to_hbm [thread:$0]  %s2636, 512, %s2634, %s2620, 128, 128, 8
        $region48: #{tpu_custom_call.1} parent=31 // pred_fallthru
          _
      $region32: #{tpu_custom_call.1} parent=5 // pred_fallthru
        _
      %p2642 = scmp.le.s32.totalorder 2, %s16
      // Predicated region
      $region49: #{tpu_custom_call.1} parent=5 // pred_check
        %p2643 = pneg %p2642
      $region50: #{tpu_custom_call.1} parent=5 // pred_check_branch
        %2645 = sbr.rel (%p2643) target = $region52
      $region51: #{tpu_custom_call.1} parent=5 // pred_region
        %s2646 = ssub.s32 %s16, 2
        // Predicated region
        $region53: #{tpu_custom_call.1} parent=51 // pred_check
          %p2647 = pneg %p129
        $region54: #{tpu_custom_call.1} parent=51 // pred_check_branch
          %2649 = sbr.rel (%p2647) target = $region56
        $region55: #{tpu_custom_call.1} parent=51 // pred_region
          %s2650 = sand.u32 %s114, 1
          %s2651 = scalar_lea.sflag [#allocation4], %s2650
          %s2652 = sand.u32 %s114, 1
          %s2653 = smul.addr %s2652, 32
          %s2654 = scalar_lea.vmem [#allocation8], %s2653
          %2655 = dma.done %s2651, 512
        $region56: #{tpu_custom_call.1} parent=51 // pred_fallthru
          _
      $region52: #{tpu_custom_call.1} parent=5 // pred_fallthru
        _
    $region6: #{tpu_custom_call.1} parent=1 // loop_footer
      %s20 = sadd.s32 1, %s16
    $region7: #{tpu_custom_call.1} parent=1 // loop_footer_branch
      %15 = sbr.rel target = $region3
    $region8: #{tpu_custom_call.1} parent=1 // loop_exit
      _
    %2656 = vsyncpa [#allocation3], 1
    %s2657 = scalar_lea.sflag [#allocation3], 1
    %2658 = vsyncpa %s2657, 1
    %2659 = vsyncpa [#allocation6], 1
    %2660 = vsyncpa [#allocation4], 1
    %s2661 = scalar_lea.sflag [#allocation4], 1
    %2662 = vsyncpa %s2661, 1

</llo_original>
